<compile_context>
chip_gen: v7x
topology: tpu7x:2x2x1
jax: 0.10.0
libtpu: 0.0.40
codegen_flags: <defaults>
</compile_context>

<pallas_src>
import jax
import jax.numpy as jnp
from jax.experimental import pallas as pl
from jax.experimental.pallas import tpu as pltpu

# Synthetic env constants (deterministic).
OBS_DIM = 16          # env.observation_space.shape == (16,)
NUM_ACTIONS = 8       # env.action_space.n
OBS_HIGH = 1.0        # np.mean(env.observation_space.high)
OBS_LOW = -1.0        # np.mean(env.observation_space.low)

H1, H2 = 400, 300     # logical hidden dims fixed by the module
H1P, H2P = 512, 384   # lane-padded hidden dims
OUT_PAD = 128         # lane-dense output width (actions in 0..7, value in 0)

BATCH_BLOCK = 128     # batch tile when B is large (parallel grid axis)


def _ddpg_kernel(s_ref, a_ref,
                 w1_ref, b1_ref, w2_ref, b2_ref,
                 wact_ref, bact_ref,
                 wa_ref, ba_ref, wv_ref, bv_ref,
                 act_out_ref, val_out_ref):
    # State backbone (normalization folded into w1/b1): computed ONCE, shared
    # by actor head and critic head.
    s = s_ref[...].astype(jnp.bfloat16)
    h1 = jnp.dot(s, w1_ref[...], preferred_element_type=jnp.float32) + b1_ref[...]
    h1 = jnp.maximum(h1, 0.0)                                  # f32 ReLU
    h2 = jnp.dot(h1.astype(jnp.bfloat16), w2_ref[...],
                 preferred_element_type=jnp.float32) + b2_ref[...]
    h2 = jnp.maximum(h2, 0.0)                                  # f32 ReLU

    # Action backbone (Linear + ReLU, see TODO above).
    a = a_ref[...].astype(jnp.bfloat16)
    ha = jnp.dot(a, wact_ref[...],
                 preferred_element_type=jnp.float32) + bact_ref[...]
    ha = jnp.maximum(ha, 0.0)

    # Actor head: Linear + Tanh on h2 (lane-dense padded output).
    act_pre = jnp.dot(h2.astype(jnp.bfloat16), wa_ref[...],
                      preferred_element_type=jnp.float32) + ba_ref[...]
    act_out_ref[...] = jnp.tanh(act_pre)

    # Critic head: Linear on (h2 + ha) (lane-dense padded output).
    hv = (h2 + ha).astype(jnp.bfloat16)
    val_out_ref[...] = jnp.dot(hv, wv_ref[...],
                               preferred_element_type=jnp.float32) + bv_ref[...]


def _fused_call(state, action, kp):
    B = state.shape[0]
    # Batch tile: single block for small / ragged batches, 128-row tiles
    # (parallel grid axis) otherwise.
    bb = B if (B <= BATCH_BLOCK or B % BATCH_BLOCK != 0) else BATCH_BLOCK
    grid = (pl.cdiv(B, bb),)

    row = lambda i: (i, 0)     # tiled along batch
    rep = lambda i: (0, 0)     # weights: same block every step (stays resident)

    in_specs = [
        pl.BlockSpec((bb, OBS_DIM), row),        # state
        pl.BlockSpec((bb, NUM_ACTIONS), row),    # action
        pl.BlockSpec((OBS_DIM, H1P), rep),       # w1 (bf16, norm folded)
        pl.BlockSpec((1, H1P), rep),             # b1 (f32)
        pl.BlockSpec((H1P, H2P), rep),           # w2 (bf16)
        pl.BlockSpec((1, H2P), rep),             # b2
        pl.BlockSpec((NUM_ACTIONS, H2P), rep),   # wact (bf16)
        pl.BlockSpec((1, H2P), rep),             # bact
        pl.BlockSpec((H2P, OUT_PAD), rep),       # wa (bf16, padded)
        pl.BlockSpec((1, OUT_PAD), rep),         # ba
        pl.BlockSpec((H2P, OUT_PAD), rep),       # wv (bf16, padded)
        pl.BlockSpec((1, OUT_PAD), rep),         # bv
    ]
    out_specs = (pl.BlockSpec((bb, OUT_PAD), row),
                 pl.BlockSpec((bb, OUT_PAD), row))

    acts_pad, vals_pad = pl.pallas_call(
        _ddpg_kernel,
        grid=grid,
        in_specs=in_specs,
        out_specs=out_specs,
        out_shape=(jax.ShapeDtypeStruct((B, OUT_PAD), jnp.float32),
                   jax.ShapeDtypeStruct((B, OUT_PAD), jnp.float32)),
        compiler_params=pltpu.CompilerParams(
            dimension_semantics=("parallel",)),
    )(state, action,
      kp["w1"], kp["b1"], kp["w2"], kp["b2"],
      kp["wact"], kp["bact"], kp["wa"], kp["ba"], kp["wv"], kp["bv"])
    return acts_pad, vals_pad


def ddpg_actor_critic(state, action, kp):
    """Fused forward: returns (actions (B, A), value (B, 1))."""
    acts_pad, vals_pad = _fused_call(state, action, kp)
    return acts_pad[:, :NUM_ACTIONS], vals_pad[:, :1]


def ddpg_forward(state, kp, action=None):
    """Mirrors DDPG.forward(state, action=None) semantics."""
    if action is None:
        acts, _ = ddpg_actor_critic(
            state, jnp.zeros((state.shape[0], NUM_ACTIONS), jnp.float32), kp)
        return acts
    _, val = ddpg_actor_critic(state, action, kp)
    return val


# ------------------------- parameter construction -------------------------

def init_params(key):
    """Raw f32 params mirroring the module's init()/final_layer_init().

    Weights stored as (in, out) (transposed PyTorch layout); biases (1, out).
    """
    ks = jax.random.split(key, 8)

    def linear_fanin(k, fan_in, fan_out):
        bound = 1.0 / jnp.sqrt(jnp.float32(fan_in))
        w = jax.random.uniform(k, (fan_in, fan_out), jnp.float32, -bound, bound)
        b = jnp.zeros((1, fan_out), jnp.float32)
        return w, b

    def linear_final(kw, kb, fan_in, fan_out):
        w = jax.random.uniform(kw, (fan_in, fan_out), jnp.float32, -0.003, 0.003)
        b = jax.random.uniform(kb, (1, fan_out), jnp.float32, -0.0003, 0.0003)
        return w, b

    w1, b1 = linear_fanin(ks[0], OBS_DIM, H1)
    w2, b2 = linear_fanin(ks[1], H1, H2)
    wact, bact = linear_fanin(ks[2], NUM_ACTIONS, H2)
    wa, ba = linear_final(ks[3], ks[4], H2, NUM_ACTIONS)
    wv, bv = linear_final(ks[5], ks[6], H2, 1)
    return dict(w1=w1, b1=b1, w2=w2, b2=b2,
                wact=wact, bact=bact, wa=wa, ba=ba, wv=wv, bv=bv)


def prepare_kernel_params(p):
    """Fold normalization into w1/b1, zero-pad to lane multiples, cast to bf16.

    Padding is strictly zero so results are exact modulo bf16 rounding:
    padded h1/h2/ha lanes are ReLU(0)=0 and padded head rows/cols are 0.
    """
    def pad(x, shape):
        z = jnp.zeros(shape, jnp.float32)
        return z.at[:x.shape[0], :x.shape[1]].set(x)

    # (state - low) / (high - low) folded into layer-1 weights/bias.
    inv = 1.0 / (OBS_HIGH - OBS_LOW)
    w1_fold = p["w1"] * inv
    b1_fold = p["b1"] + (-OBS_LOW * inv) * jnp.sum(p["w1"], axis=0, keepdims=True)

    return dict(
        w1=pad(w1_fold, (OBS_DIM, H1P)).astype(jnp.bfloat16),
        b1=pad(b1_fold, (1, H1P)),
        w2=pad(p["w2"], (H1P, H2P)).astype(jnp.bfloat16),
        b2=pad(p["b2"], (1, H2P)),
        wact=pad(p["wact"], (NUM_ACTIONS, H2P)).astype(jnp.bfloat16),
        bact=pad(p["bact"], (1, H2P)),
        wa=pad(p["wa"], (H2P, OUT_PAD)).astype(jnp.bfloat16),
        ba=pad(p["ba"], (1, OUT_PAD)),
        wv=pad(p["wv"], (H2P, OUT_PAD)).astype(jnp.bfloat16),
        bv=pad(p["bv"], (1, OUT_PAD)),
    )


# ------------------------------- references -------------------------------

def _reference_actor(state, p):
    s = (state - OBS_LOW) / (OBS_HIGH - OBS_LOW)
    h1 = jnp.maximum(s @ p["w1"] + p["b1"], 0.0)
    h2 = jnp.maximum(h1 @ p["w2"] + p["b2"], 0.0)
    return jnp.tanh(h2 @ p["wa"] + p["ba"])


def _reference_critic(state, action, p):
    s = (state - OBS_LOW) / (OBS_HIGH - OBS_LOW)
    h1 = jnp.maximum(s @ p["w1"] + p["b1"], 0.0)
    h2 = jnp.maximum(h1 @ p["w2"] + p["b2"], 0.0)
    ha = jnp.maximum(action @ p["wact"] + p["bact"], 0.0)
    return (h2 + ha) @ p["wv"] + p["bv"]


if __name__ == "__main__":
    key = jax.random.PRNGKey(0)
    kp_key, ks_key, ka_key = jax.random.split(key, 3)

    B = 8
    raw_params = init_params(kp_key)
    kernel_params = prepare_kernel_params(raw_params)

    state = jax.random.uniform(ks_key, (B, OBS_DIM), jnp.float32,
                               minval=OBS_LOW, maxval=OBS_HIGH)
    action = jax.random.uniform(ka_key, (B, NUM_ACTIONS), jnp.float32,
                                minval=-1.0, maxval=1.0)

    # Fused actor+critic (single launch, shared backbone).
    actions_out, value_out = ddpg_actor_critic(state, action, kernel_params)
    actions_out = jax.block_until_ready(actions_out)
    value_out = jax.block_until_ready(value_out)

    # forward(state) semantics (actor-only path).
    actor_only = jax.block_until_ready(ddpg_forward(state, kernel_params))

    assert actions_out.shape == (B, NUM_ACTIONS)
    assert value_out.shape == (B, 1)
    assert actor_only.shape == (B, NUM_ACTIONS)

    ref_a = _reference_actor(state, raw_params)
    ref_v = _reference_critic(state, action, raw_params)

    # bf16 MXU operands -> loosened tolerances vs the pure-f32 reference.
    assert jnp.allclose(actions_out, ref_a, atol=2e-2, rtol=2e-2)
    assert jnp.allclose(actor_only, ref_a, atol=2e-2, rtol=2e-2)
    assert jnp.allclose(value_out, ref_v, atol=2e-2, rtol=2e-2)

    print("KERNEL_OK")
</pallas_src>

<mosaic_0001>
module attributes {stable_mosaic.version = 11 : i64} {
  func.func @_ddpg_kernel(%arg0: i32, %arg1: memref<8x16xf32, #tpu.memory_space<vmem>>, %arg2: memref<8x8xf32, #tpu.memory_space<vmem>>, %arg3: memref<16x512xbf16, #tpu.memory_space<vmem>>, %arg4: memref<1x512xf32, #tpu.memory_space<vmem>>, %arg5: memref<512x384xbf16, #tpu.memory_space<vmem>>, %arg6: memref<1x384xf32, #tpu.memory_space<vmem>>, %arg7: memref<8x384xbf16, #tpu.memory_space<vmem>>, %arg8: memref<1x384xf32, #tpu.memory_space<vmem>>, %arg9: memref<384x128xbf16, #tpu.memory_space<vmem>>, %arg10: memref<1x128xf32, #tpu.memory_space<vmem>>, %arg11: memref<384x128xbf16, #tpu.memory_space<vmem>>, %arg12: memref<1x128xf32, #tpu.memory_space<vmem>>, %arg13: memref<8x128xf32, #tpu.memory_space<vmem>>, %arg14: memref<8x128xf32, #tpu.memory_space<vmem>>) attributes {dimension_semantics = [#tpu.dimension_semantics<parallel>], iteration_bounds = array<i64: 1>, scalar_prefetch = 0 : i64, scratch_operands = 0 : i64, tpu.core_type = #tpu.core_type<tc>, window_params = [{transform_indices = @transform_0, window_bounds = array<i64: 8, 16>}, {transform_indices = @transform_1, window_bounds = array<i64: 8, 8>}, {pipeline_mode = #tpu.pipeline_mode<synchronous>, transform_indices = @transform_2, window_bounds = array<i64: 16, 512>}, {pipeline_mode = #tpu.pipeline_mode<synchronous>, transform_indices = @transform_3, window_bounds = array<i64: 1, 512>}, {pipeline_mode = #tpu.pipeline_mode<synchronous>, transform_indices = @transform_4, window_bounds = array<i64: 512, 384>}, {pipeline_mode = #tpu.pipeline_mode<synchronous>, transform_indices = @transform_5, window_bounds = array<i64: 1, 384>}, {pipeline_mode = #tpu.pipeline_mode<synchronous>, transform_indices = @transform_6, window_bounds = array<i64: 8, 384>}, {pipeline_mode = #tpu.pipeline_mode<synchronous>, transform_indices = @transform_7, window_bounds = array<i64: 1, 384>}, {pipeline_mode = #tpu.pipeline_mode<synchronous>, transform_indices = @transform_8, window_bounds = array<i64: 384, 128>}, {pipeline_mode = #tpu.pipeline_mode<synchronous>, transform_indices = @transform_9, window_bounds = array<i64: 1, 128>}, {pipeline_mode = #tpu.pipeline_mode<synchronous>, transform_indices = @transform_10, window_bounds = array<i64: 384, 128>}, {pipeline_mode = #tpu.pipeline_mode<synchronous>, transform_indices = @transform_11, window_bounds = array<i64: 1, 128>}, {transform_indices = @transform_12, window_bounds = array<i64: 8, 128>}, {transform_indices = @transform_13, window_bounds = array<i64: 8, 128>}]} {
    %c0 = arith.constant 0 : index
    %c0_0 = arith.constant 0 : index
    %0 = vector.load %arg1[%c0, %c0_0] : memref<8x16xf32, #tpu.memory_space<vmem>>, vector<8x16xf32>
    %1 = arith.truncf %0 : vector<8x16xf32> to vector<8x16xbf16>
    %c0_1 = arith.constant 0 : index
    %c0_2 = arith.constant 0 : index
    %2 = vector.load %arg3[%c0_1, %c0_2] : memref<16x512xbf16, #tpu.memory_space<vmem>>, vector<16x512xbf16>
    %cst = arith.constant dense<0.000000e+00> : vector<8x512xf32>
    %3 = tpu.matmul %1, %2, %cst {dimension_numbers = #tpu.dot_dimension_numbers<[1], [0], [0], [1], [0, 0, 1, 1], [], []>} : vector<8x16xbf16>, vector<16x512xbf16>, vector<8x512xf32> -> vector<8x512xf32>
    %c0_3 = arith.constant 0 : index
    %c0_4 = arith.constant 0 : index
    %4 = vector.load %arg4[%c0_3, %c0_4] : memref<1x512xf32, #tpu.memory_space<vmem>>, vector<1x512xf32>
    %5 = vector.broadcast %4 : vector<1x512xf32> to vector<8x512xf32>
    %6 = arith.addf %3, %5 : vector<8x512xf32>
    %cst_5 = arith.constant 0.000000e+00 : f32
    %7 = vector.broadcast %cst_5 : f32 to vector<8x512xf32>
    %8 = arith.maximumf %6, %7 : vector<8x512xf32>
    %9 = arith.truncf %8 : vector<8x512xf32> to vector<8x512xbf16>
    %c0_6 = arith.constant 0 : index
    %c0_7 = arith.constant 0 : index
    %10 = vector.load %arg5[%c0_6, %c0_7] : memref<512x384xbf16, #tpu.memory_space<vmem>>, vector<512x384xbf16>
    %cst_8 = arith.constant dense<0.000000e+00> : vector<8x384xf32>
    %11 = tpu.matmul %9, %10, %cst_8 {dimension_numbers = #tpu.dot_dimension_numbers<[1], [0], [0], [1], [0, 0, 1, 1], [], []>} : vector<8x512xbf16>, vector<512x384xbf16>, vector<8x384xf32> -> vector<8x384xf32>
    %c0_9 = arith.constant 0 : index
    %c0_10 = arith.constant 0 : index
    %12 = vector.load %arg6[%c0_9, %c0_10] : memref<1x384xf32, #tpu.memory_space<vmem>>, vector<1x384xf32>
    %13 = vector.broadcast %12 : vector<1x384xf32> to vector<8x384xf32>
    %14 = arith.addf %11, %13 : vector<8x384xf32>
    %cst_11 = arith.constant 0.000000e+00 : f32
    %15 = vector.broadcast %cst_11 : f32 to vector<8x384xf32>
    %16 = arith.maximumf %14, %15 : vector<8x384xf32>
    %c0_12 = arith.constant 0 : index
    %c0_13 = arith.constant 0 : index
    %17 = vector.load %arg2[%c0_12, %c0_13] : memref<8x8xf32, #tpu.memory_space<vmem>>, vector<8x8xf32>
    %18 = arith.truncf %17 : vector<8x8xf32> to vector<8x8xbf16>
    %c0_14 = arith.constant 0 : index
    %c0_15 = arith.constant 0 : index
    %19 = vector.load %arg7[%c0_14, %c0_15] : memref<8x384xbf16, #tpu.memory_space<vmem>>, vector<8x384xbf16>
    %cst_16 = arith.constant dense<0.000000e+00> : vector<8x384xf32>
    %20 = tpu.matmul %18, %19, %cst_16 {dimension_numbers = #tpu.dot_dimension_numbers<[1], [0], [0], [1], [0, 0, 1, 1], [], []>} : vector<8x8xbf16>, vector<8x384xbf16>, vector<8x384xf32> -> vector<8x384xf32>
    %c0_17 = arith.constant 0 : index
    %c0_18 = arith.constant 0 : index
    %21 = vector.load %arg8[%c0_17, %c0_18] : memref<1x384xf32, #tpu.memory_space<vmem>>, vector<1x384xf32>
    %22 = vector.broadcast %21 : vector<1x384xf32> to vector<8x384xf32>
    %23 = arith.addf %20, %22 : vector<8x384xf32>
    %cst_19 = arith.constant 0.000000e+00 : f32
    %24 = vector.broadcast %cst_19 : f32 to vector<8x384xf32>
    %25 = arith.maximumf %23, %24 : vector<8x384xf32>
    %26 = arith.truncf %16 : vector<8x384xf32> to vector<8x384xbf16>
    %c0_20 = arith.constant 0 : index
    %c0_21 = arith.constant 0 : index
    %27 = vector.load %arg9[%c0_20, %c0_21] : memref<384x128xbf16, #tpu.memory_space<vmem>>, vector<384x128xbf16>
    %cst_22 = arith.constant dense<0.000000e+00> : vector<8x128xf32>
    %28 = tpu.matmul %26, %27, %cst_22 {dimension_numbers = #tpu.dot_dimension_numbers<[1], [0], [0], [1], [0, 0, 1, 1], [], []>} : vector<8x384xbf16>, vector<384x128xbf16>, vector<8x128xf32> -> vector<8x128xf32>
    %c0_23 = arith.constant 0 : index
    %c0_24 = arith.constant 0 : index
    %29 = vector.load %arg10[%c0_23, %c0_24] : memref<1x128xf32, #tpu.memory_space<vmem>>, vector<1x128xf32>
    %30 = vector.broadcast %29 : vector<1x128xf32> to vector<8x128xf32>
    %31 = arith.addf %28, %30 : vector<8x128xf32>
    %32 = math.tanh %31 : vector<8x128xf32>
    %c0_25 = arith.constant 0 : index
    %c0_26 = arith.constant 0 : index
    %33 = vector.load %arg13[%c0_25, %c0_26] : memref<8x128xf32, #tpu.memory_space<vmem>>, vector<8x128xf32>
    tpu.vector_store %arg13[%c0_25, %c0_26], %32 {strides = array<i32>} : memref<8x128xf32, #tpu.memory_space<vmem>>, vector<8x128xf32>,
    %34 = arith.addf %16, %25 : vector<8x384xf32>
    %35 = arith.truncf %34 : vector<8x384xf32> to vector<8x384xbf16>
    %c0_27 = arith.constant 0 : index
    %c0_28 = arith.constant 0 : index
    %36 = vector.load %arg11[%c0_27, %c0_28] : memref<384x128xbf16, #tpu.memory_space<vmem>>, vector<384x128xbf16>
    %cst_29 = arith.constant dense<0.000000e+00> : vector<8x128xf32>
    %37 = tpu.matmul %35, %36, %cst_29 {dimension_numbers = #tpu.dot_dimension_numbers<[1], [0], [0], [1], [0, 0, 1, 1], [], []>} : vector<8x384xbf16>, vector<384x128xbf16>, vector<8x128xf32> -> vector<8x128xf32>
    %c0_30 = arith.constant 0 : index
    %c0_31 = arith.constant 0 : index
    %38 = vector.load %arg12[%c0_30, %c0_31] : memref<1x128xf32, #tpu.memory_space<vmem>>, vector<1x128xf32>
    %39 = vector.broadcast %38 : vector<1x128xf32> to vector<8x128xf32>
    %40 = arith.addf %37, %39 : vector<8x128xf32>
    %c0_32 = arith.constant 0 : index
    %c0_33 = arith.constant 0 : index
    %41 = vector.load %arg14[%c0_32, %c0_33] : memref<8x128xf32, #tpu.memory_space<vmem>>, vector<8x128xf32>
    tpu.vector_store %arg14[%c0_32, %c0_33], %40 {strides = array<i32>} : memref<8x128xf32, #tpu.memory_space<vmem>>, vector<8x128xf32>,
    return
  }
  func.func @transform_0(%arg0: i32) -> (i32, i32) {
    %c0_i32 = arith.constant 0 : i32
    %c0_i32_0 = arith.constant 0 : i32
    return %arg0, %c0_i32 : i32, i32
  }
  func.func @transform_1(%arg0: i32) -> (i32, i32) {
    %c0_i32 = arith.constant 0 : i32
    %c0_i32_0 = arith.constant 0 : i32
    return %arg0, %c0_i32 : i32, i32
  }
  func.func @transform_2(%arg0: i32) -> (i32, i32) {
    %c0_i32 = arith.constant 0 : i32
    %c0_i32_0 = arith.constant 0 : i32
    %c0_i32_1 = arith.constant 0 : i32
    return %c0_i32, %c0_i32_0 : i32, i32
  }
  func.func @transform_3(%arg0: i32) -> (i32, i32) {
    %c0_i32 = arith.constant 0 : i32
    %c0_i32_0 = arith.constant 0 : i32
    %c0_i32_1 = arith.constant 0 : i32
    return %c0_i32, %c0_i32_0 : i32, i32
  }
  func.func @transform_4(%arg0: i32) -> (i32, i32) {
    %c0_i32 = arith.constant 0 : i32
    %c0_i32_0 = arith.constant 0 : i32
    %c0_i32_1 = arith.constant 0 : i32
    return %c0_i32, %c0_i32_0 : i32, i32
  }
  func.func @transform_5(%arg0: i32) -> (i32, i32) {
    %c0_i32 = arith.constant 0 : i32
    %c0_i32_0 = arith.constant 0 : i32
    %c0_i32_1 = arith.constant 0 : i32
    return %c0_i32, %c0_i32_0 : i32, i32
  }
  func.func @transform_6(%arg0: i32) -> (i32, i32) {
    %c0_i32 = arith.constant 0 : i32
    %c0_i32_0 = arith.constant 0 : i32
    %c0_i32_1 = arith.constant 0 : i32
    return %c0_i32, %c0_i32_0 : i32, i32
  }
  func.func @transform_7(%arg0: i32) -> (i32, i32) {
    %c0_i32 = arith.constant 0 : i32
    %c0_i32_0 = arith.constant 0 : i32
    %c0_i32_1 = arith.constant 0 : i32
    return %c0_i32, %c0_i32_0 : i32, i32
  }
  func.func @transform_8(%arg0: i32) -> (i32, i32) {
    %c0_i32 = arith.constant 0 : i32
    %c0_i32_0 = arith.constant 0 : i32
    %c0_i32_1 = arith.constant 0 : i32
    return %c0_i32, %c0_i32_0 : i32, i32
  }
  func.func @transform_9(%arg0: i32) -> (i32, i32) {
    %c0_i32 = arith.constant 0 : i32
    %c0_i32_0 = arith.constant 0 : i32
    %c0_i32_1 = arith.constant 0 : i32
    return %c0_i32, %c0_i32_0 : i32, i32
  }
  func.func @transform_10(%arg0: i32) -> (i32, i32) {
    %c0_i32 = arith.constant 0 : i32
    %c0_i32_0 = arith.constant 0 : i32
    %c0_i32_1 = arith.constant 0 : i32
    return %c0_i32, %c0_i32_0 : i32, i32
  }
  func.func @transform_11(%arg0: i32) -> (i32, i32) {
    %c0_i32 = arith.constant 0 : i32
    %c0_i32_0 = arith.constant 0 : i32
    %c0_i32_1 = arith.constant 0 : i32
    return %c0_i32, %c0_i32_0 : i32, i32
  }
  func.func @transform_12(%arg0: i32) -> (i32, i32) {
    %c0_i32 = arith.constant 0 : i32
    %c0_i32_0 = arith.constant 0 : i32
    return %arg0, %c0_i32 : i32, i32
  }
  func.func @transform_13(%arg0: i32) -> (i32, i32) {
    %c0_i32 = arith.constant 0 : i32
    %c0_i32_0 = arith.constant 0 : i32
    return %arg0, %c0_i32 : i32, i32
  }
}

</mosaic_0001>

<llo_original>
// kernel: tpu_custom_call.1
$region0: #{tpu_custom_call.1}
  #allocation0 [shape = 'u32[]', space=smem, size = 0x4, offset = 0x4, fixed_abs, tag = 'smem constant byte address 0x4 - core index']
  #allocation1 [shape = 'u32[144,128]{1,0:T(1,128)}', space=vmem, size = 0x12000, scoped, tag = 'internal scratch']
  %s0 = inlined_call_operand.hbm [shape: f32[8,16], index: 0, kind: input, shape index: {}]
  %s1 = inlined_call_operand.hbm [shape: f32[8,8], index: 1, kind: input, shape index: {}]
  %s2 = inlined_call_operand.hbm [shape: bf16[16,512], index: 2, kind: input, shape index: {}]
  %s3 = inlined_call_operand.vmem [shape: f32[1,512], index: 3, kind: input, shape index: {}]
  %s4 = inlined_call_operand.hbm [shape: bf16[512,384], index: 4, kind: input, shape index: {}]
  %s5 = inlined_call_operand.vmem [shape: f32[1,384], index: 5, kind: input, shape index: {}]
  %s6 = inlined_call_operand.vmem [shape: bf16[8,384], index: 6, kind: input, shape index: {}]
  %s7 = inlined_call_operand.vmem [shape: f32[1,384], index: 7, kind: input, shape index: {}]
  %s8 = inlined_call_operand.hbm [shape: bf16[384,128], index: 8, kind: input, shape index: {}]
  %s9 = inlined_call_operand.vmem [shape: f32[1,128], index: 9, kind: input, shape index: {}]
  %s10 = inlined_call_operand.hbm [shape: bf16[384,128], index: 10, kind: input, shape index: {}]
  %s11 = inlined_call_operand.vmem [shape: f32[1,128], index: 11, kind: input, shape index: {}]
  %s12 = inlined_call_operand.hbm [shape: f32[8,128], index: 12, kind: output, shape index: {0}]
  %s13 = inlined_call_operand.hbm [shape: f32[8,128], index: 13, kind: output, shape index: {1}]
  %14 = xla_tuple %s12, %s13
  %s15 = sld [smem:[#allocation0]]
  $region90: #{tpu_custom_call.1} parent=0
    _
  %s17 = ssub.s32 1, %s15
  %s18 = scalar_select 0, %s17, %s15
  $region1: #{tpu_custom_call.1} parent=0
    #allocation2 [shape = 'u8[4096]{0}', space=vmem, size = 0x1000, scoped, tag = 'input window, operand 0, single buffered']
    #allocation3 [shape = 's32[1]{0}', space=sflag, size = 0x4, scoped, tag = 'scoped memory for tpu_custom_call.1']
    #allocation4 [shape = 's32[1]{0}', space=sflag, size = 0x4, scoped, tag = 'scoped memory for tpu_custom_call.1']
    #allocation5 [shape = 'u8[4096]{0}', space=vmem, size = 0x1000, scoped, tag = 'input window, operand 1, single buffered']
    #allocation6 [shape = 's32[1]{0}', space=sflag, size = 0x4, scoped, tag = 'scoped memory for tpu_custom_call.1']
    #allocation7 [shape = 'u8[16384]{0}', space=vmem, size = 0x4000, scoped, tag = 'input window, operand 2, single buffered']
    #allocation8 [shape = 'u8[393216]{0}', space=vmem, size = 0x60000, scoped, tag = 'input window, operand 4, single buffered']
    #allocation9 [shape = 's32[1]{0}', space=sflag, size = 0x4, scoped, tag = 'scoped memory for tpu_custom_call.1']
    #allocation10 [shape = 'u8[98304]{0}', space=vmem, size = 0x18000, scoped, tag = 'input window, operand 8, single buffered']
    #allocation11 [shape = 'u8[98304]{0}', space=vmem, size = 0x18000, scoped, tag = 'input window, operand 10, single buffered']
    #allocation12 [shape = 's32[1]{0}', space=sflag, size = 0x4, scoped, tag = 'scoped memory for tpu_custom_call.1']
    #allocation13 [shape = 'u8[4096]{0}', space=vmem, size = 0x1000, scoped, tag = 'output window, operand 0, single buffered']
    #allocation14 [shape = 'u8[4096]{0}', space=vmem, size = 0x1000, scoped, tag = 'output window, operand 1, single buffered']
    #allocation15 [shape = 's32[1]{0}', space=sflag, size = 0x4, scoped, tag = 'scoped memory for tpu_custom_call.1']
    %19 = vsyncpa [#allocation3], 0
    %20 = vsyncpa [#allocation6], 0
    %21 = vsyncpa [#allocation9], 0
    %22 = vsyncpa [#allocation12], 0
    %23 = vsyncpa [#allocation4], 0
    %24 = vsyncpa [#allocation15], 0
    // Predicated region
    $region2: #{tpu_custom_call.1} parent=1 // pred_check
      _
    $region3: #{tpu_custom_call.1} parent=1 // pred_check_branch
      %26 = sbr.rel (0) target = $region5
    $region4: #{tpu_custom_call.1} parent=1 // pred_region
      %s28 = ssub.s32 128, 128
      %29 = vsyncadd [#allocation3], %s28
      %s31 = sshll.u32 [#allocation2], 4
      %s32 = int_to_ptr.vmem [resolvable:$true] %s31
      %34 = dma.hbm_to_vmem [thread:$0]  %s0, 128, %s32, [#allocation3]
    $region5: #{tpu_custom_call.1} parent=1 // pred_fallthru
      _
    // Predicated region
    $region6: #{tpu_custom_call.1} parent=1 // pred_check
      _
    $region7: #{tpu_custom_call.1} parent=1 // pred_check_branch
      %36 = sbr.rel (0) target = $region9
    $region8: #{tpu_custom_call.1} parent=1 // pred_region
      %s38 = ssub.s32 128, 128
      %39 = vsyncadd [#allocation6], %s38
      %s41 = sshll.u32 [#allocation5], 4
      %s42 = int_to_ptr.vmem [resolvable:$true] %s41
      %44 = dma.hbm_to_vmem [thread:$0]  %s1, 128, %s42, [#allocation6]
    $region9: #{tpu_custom_call.1} parent=1 // pred_fallthru
      _
    // Predicated region
    $region10: #{tpu_custom_call.1} parent=1 // pred_check
      _
    $region11: #{tpu_custom_call.1} parent=1 // pred_check_branch
      %46 = sbr.rel (0) target = $region13
    $region12: #{tpu_custom_call.1} parent=1 // pred_region
      %s48 = ssub.s32 512, 512
      %49 = vsyncadd [#allocation6], %s48
      %s50 = sshll.u32 [#allocation7], 4
      %s51 = int_to_ptr.vmem [resolvable:$true] %s50
      %56 = dma.hbm_to_vmem [thread:$0]  %s2, 512, %s51, [#allocation6], 256, 256, 16
    $region13: #{tpu_custom_call.1} parent=1 // pred_fallthru
      _
    // Predicated region
    $region14: #{tpu_custom_call.1} parent=1 // pred_check
      _
    $region15: #{tpu_custom_call.1} parent=1 // pred_check_branch
      %58 = sbr.rel (0) target = $region17
    $region16: #{tpu_custom_call.1} parent=1 // pred_region
      _
    $region17: #{tpu_custom_call.1} parent=1 // pred_fallthru
      _
    // Predicated region
    $region18: #{tpu_custom_call.1} parent=1 // pred_check
      _
    $region19: #{tpu_custom_call.1} parent=1 // pred_check_branch
      %60 = sbr.rel (0) target = $region21
    $region20: #{tpu_custom_call.1} parent=1 // pred_region
      %s62 = ssub.s32 12288, 12288
      %63 = vsyncadd [#allocation9], %s62
      %s64 = sshll.u32 [#allocation8], 4
      %s65 = int_to_ptr.vmem [resolvable:$true] %s64
      %70 = dma.hbm_to_vmem [thread:$0]  %s4, 12288, %s65, [#allocation9], 192, 192, 12
    $region21: #{tpu_custom_call.1} parent=1 // pred_fallthru
      _
    // Predicated region
    $region22: #{tpu_custom_call.1} parent=1 // pred_check
      _
    $region23: #{tpu_custom_call.1} parent=1 // pred_check_branch
      %72 = sbr.rel (0) target = $region25
    $region24: #{tpu_custom_call.1} parent=1 // pred_region
      _
    $region25: #{tpu_custom_call.1} parent=1 // pred_fallthru
      _
    // Predicated region
    $region26: #{tpu_custom_call.1} parent=1 // pred_check
      _
    $region27: #{tpu_custom_call.1} parent=1 // pred_check_branch
      %74 = sbr.rel (0) target = $region29
    $region28: #{tpu_custom_call.1} parent=1 // pred_region
      _
    $region29: #{tpu_custom_call.1} parent=1 // pred_fallthru
      _
    // Predicated region
    $region30: #{tpu_custom_call.1} parent=1 // pred_check
      _
    $region31: #{tpu_custom_call.1} parent=1 // pred_check_branch
      %76 = sbr.rel (0) target = $region33
    $region32: #{tpu_custom_call.1} parent=1 // pred_region
      _
    $region33: #{tpu_custom_call.1} parent=1 // pred_fallthru
      _
    // Predicated region
    $region34: #{tpu_custom_call.1} parent=1 // pred_check
      _
    $region35: #{tpu_custom_call.1} parent=1 // pred_check_branch
      %78 = sbr.rel (0) target = $region37
    $region36: #{tpu_custom_call.1} parent=1 // pred_region
      %s80 = ssub.s32 3072, 3072
      %81 = vsyncadd [#allocation9], %s80
      %s82 = sshll.u32 [#allocation10], 4
      %s83 = int_to_ptr.vmem [resolvable:$true] %s82
      %88 = dma.hbm_to_vmem [thread:$0]  %s8, 3072, %s83, [#allocation9], 64, 64, 4
    $region37: #{tpu_custom_call.1} parent=1 // pred_fallthru
      _
    // Predicated region
    $region38: #{tpu_custom_call.1} parent=1 // pred_check
      _
    $region39: #{tpu_custom_call.1} parent=1 // pred_check_branch
      %90 = sbr.rel (0) target = $region41
    $region40: #{tpu_custom_call.1} parent=1 // pred_region
      _
    $region41: #{tpu_custom_call.1} parent=1 // pred_fallthru
      _
    // Predicated region
    $region42: #{tpu_custom_call.1} parent=1 // pred_check
      _
    $region43: #{tpu_custom_call.1} parent=1 // pred_check_branch
      %92 = sbr.rel (0) target = $region45
    $region44: #{tpu_custom_call.1} parent=1 // pred_region
      %s94 = ssub.s32 3072, 3072
      %95 = vsyncadd [#allocation12], %s94
      %s96 = sshll.u32 [#allocation11], 4
      %s97 = int_to_ptr.vmem [resolvable:$true] %s96
      %102 = dma.hbm_to_vmem [thread:$0]  %s10, 3072, %s97, [#allocation12], 64, 64, 4
    $region45: #{tpu_custom_call.1} parent=1 // pred_fallthru
      _
    // Predicated region
    $region46: #{tpu_custom_call.1} parent=1 // pred_check
      _
    $region47: #{tpu_custom_call.1} parent=1 // pred_check_branch
      %104 = sbr.rel (0) target = $region49
    $region48: #{tpu_custom_call.1} parent=1 // pred_region
      _
    $region49: #{tpu_custom_call.1} parent=1 // pred_fallthru
      _
    // Predicated region
    $region50: #{tpu_custom_call.1} parent=1 // pred_check
      _
    $region51: #{tpu_custom_call.1} parent=1 // pred_check_branch
      %106 = sbr.rel (0) target = $region53
    $region52: #{tpu_custom_call.1} parent=1 // pred_region
      %107 = dma.done [#allocation3], 128
    $region53: #{tpu_custom_call.1} parent=1 // pred_fallthru
      _
    // Predicated region
    $region54: #{tpu_custom_call.1} parent=1 // pred_check
      _
    $region55: #{tpu_custom_call.1} parent=1 // pred_check_branch
      %109 = sbr.rel (0) target = $region57
    $region56: #{tpu_custom_call.1} parent=1 // pred_region
      %110 = dma.done [#allocation6], 128
    $region57: #{tpu_custom_call.1} parent=1 // pred_fallthru
      _
    // Predicated region
    $region58: #{tpu_custom_call.1} parent=1 // pred_check
      _
    $region59: #{tpu_custom_call.1} parent=1 // pred_check_branch
      %112 = sbr.rel (0) target = $region61
    $region60: #{tpu_custom_call.1} parent=1 // pred_region
      %113 = dma.done [#allocation6], 512
    $region61: #{tpu_custom_call.1} parent=1 // pred_fallthru
      _
    // Predicated region
    $region62: #{tpu_custom_call.1} parent=1 // pred_check
      _
    $region63: #{tpu_custom_call.1} parent=1 // pred_check_branch
      %115 = sbr.rel (0) target = $region65
    $region64: #{tpu_custom_call.1} parent=1 // pred_region
      %116 = dma.done [#allocation9], 12288
    $region65: #{tpu_custom_call.1} parent=1 // pred_fallthru
      _
    // Predicated region
    $region66: #{tpu_custom_call.1} parent=1 // pred_check
      _
    $region67: #{tpu_custom_call.1} parent=1 // pred_check_branch
      %118 = sbr.rel (0) target = $region69
    $region68: #{tpu_custom_call.1} parent=1 // pred_region
      %119 = dma.done [#allocation9], 3072
    $region69: #{tpu_custom_call.1} parent=1 // pred_fallthru
      _
    // Predicated region
    $region70: #{tpu_custom_call.1} parent=1 // pred_check
      _
    $region71: #{tpu_custom_call.1} parent=1 // pred_check_branch
      %121 = sbr.rel (0) target = $region73
    $region72: #{tpu_custom_call.1} parent=1 // pred_region
      %122 = dma.done [#allocation12], 3072
    $region73: #{tpu_custom_call.1} parent=1 // pred_fallthru
      _
    %v124 = vld [vmem:[#allocation2] sm:$0xff]
    %v125 = vpack.c.bf16 %v124, %v124
    %v126 = vld [vmem:[#allocation7] sm:$0xff]
    %v127 = vld [vmem:[#allocation7 + $0x8] sm:$0xff]
    %v128 = vld [vmem:[#allocation7 + $0x10] sm:$0xff]
    %v129 = vld [vmem:[#allocation7 + $0x18] sm:$0xff]
    %v130 = vld [vmem:[%s3] sm:$0xf]
    %v132 = vlaneseq
    %v133 = vshrl.u32 %v132, 7
    %v134 = vsub.s32 0, %v133
    %v135 = vrot.slane %v130, %v134
    %v136 = vlaneseq
    %v137 = vshrl.u32 %v136, 7
    %v138 = vsub.s32 1, %v137
    %v139 = vrot.slane %v130, %v138
    %v140 = vlaneseq
    %v141 = vshrl.u32 %v140, 7
    %v142 = vsub.s32 2, %v141
    %v143 = vrot.slane %v130, %v142
    %v144 = vlaneseq
    %v145 = vshrl.u32 %v144, 7
    %v146 = vsub.s32 3, %v145
    %v147 = vrot.slane %v130, %v146
    %v156 = vunpack.c.l.b16 %v126
    %v157 = vunpack.c.h.b16 %v126
    %v158 = vunpack.c.l.b16 %v127
    %v159 = vunpack.c.h.b16 %v127
    %v160 = vunpack.c.l.b16 %v128
    %v161 = vunpack.c.h.b16 %v128
    %v162 = vunpack.c.l.b16 %v129
    %v163 = vunpack.c.h.b16 %v129
    %v164 = vpack.c.b16 %v160, %v156
    %v165 = vpack.c.b16 %v161, %v157
    %v166 = vpack.c.b16 %v162, %v158
    %v167 = vpack.c.b16 %v163, %v159
    %vm172 = vcmask 130048
    %v174 = vsel %vm172, %v125, 0
    %176 = vmatprep.subr.bf16.mxu0 %v165
    %177 = vmatpush1.bf16.msra.mxu0 %v164
    %178 = vmatprep.subr.bf16.mxu0 0
    %179 = vmatpush1.bf16.msra.mxu0 0
    %180 = vmatprep.subr.bf16.mxu0 0
    %181 = vmatpush1.bf16.msra.mxu0 0
    %182 = vmatprep.subr.bf16.mxu0 0
    %183 = vmatpush1.bf16.msra.mxu0 0
    %184 = vmatprep.subr.bf16.mxu0 0
    %185 = vmatpush1.bf16.msra.mxu0 0
    %186 = vmatprep.subr.bf16.mxu0 0
    %187 = vmatpush1.bf16.msra.mxu0 0
    %188 = vmatprep.subr.bf16.mxu0 0
    %189 = vmatpush1.bf16.msra.mxu0 0
    %190 = vmatprep.subr.bf16.mxu0 0
    %191 = vmatpush1.bf16.msra.mxu0 0
    %192 = vmatprep.subr.bf16.mxu0 0
    %193 = vmatpush1.bf16.msra.mxu0 0
    %194 = vmatprep.subr.bf16.mxu0 0
    %195 = vmatpush1.bf16.msra.mxu0 0
    %196 = vmatprep.subr.bf16.mxu0 0
    %197 = vmatpush1.bf16.msra.mxu0 0
    %198 = vmatprep.subr.bf16.mxu0 0
    %199 = vmatpush1.bf16.msra.mxu0 0
    %200 = vmatprep.subr.bf16.mxu0 0
    %201 = vmatpush1.bf16.msra.mxu0 0
    %202 = vmatprep.subr.bf16.mxu0 0
    %203 = vmatpush1.bf16.msra.mxu0 0
    %204 = vmatprep.subr.bf16.mxu0 0
    %205 = vmatpush1.bf16.msra.mxu0 0
    %206 = vmatprep.subr.bf16.mxu0 0
    %207 = vmatpush1.bf16.msra.mxu0 0
    %208 = vmatprep.mubr.bf16.mxu0 0
    %209 = vmatmul.mubr.bf16.gmra.mrb[0].mxu0 %v174
    %v210 = vpop.f32.mrb[0].mxu0
    %v211 = vadd.f32 %v135, %v210
    %v212 = vpop.f32.mrb[0].mxu0
    %v213 = vadd.f32 %v139, %v212
    %v214 = vpop.f32.mrb[0].mxu0
    %v215 = vpop.f32.mrb[0].mxu0
    %216 = vdwg.mxu0
    %217 = vmatprep.subr.bf16.mxu0 %v167
    %218 = vmatpush1.bf16.msra.mxu0 %v166
    %219 = vmatprep.subr.bf16.mxu0 0
    %220 = vmatpush1.bf16.msra.mxu0 0
    %221 = vmatprep.subr.bf16.mxu0 0
    %222 = vmatpush1.bf16.msra.mxu0 0
    %223 = vmatprep.subr.bf16.mxu0 0
    %224 = vmatpush1.bf16.msra.mxu0 0
    %225 = vmatprep.subr.bf16.mxu0 0
    %226 = vmatpush1.bf16.msra.mxu0 0
    %227 = vmatprep.subr.bf16.mxu0 0
    %228 = vmatpush1.bf16.msra.mxu0 0
    %229 = vmatprep.subr.bf16.mxu0 0
    %230 = vmatpush1.bf16.msra.mxu0 0
    %231 = vmatprep.subr.bf16.mxu0 0
    %232 = vmatpush1.bf16.msra.mxu0 0
    %233 = vmatprep.subr.bf16.mxu0 0
    %234 = vmatpush1.bf16.msra.mxu0 0
    %235 = vmatprep.subr.bf16.mxu0 0
    %236 = vmatpush1.bf16.msra.mxu0 0
    %237 = vmatprep.subr.bf16.mxu0 0
    %238 = vmatpush1.bf16.msra.mxu0 0
    %239 = vmatprep.subr.bf16.mxu0 0
    %240 = vmatpush1.bf16.msra.mxu0 0
    %241 = vmatprep.subr.bf16.mxu0 0
    %242 = vmatpush1.bf16.msra.mxu0 0
    %243 = vmatprep.subr.bf16.mxu0 0
    %244 = vmatpush1.bf16.msra.mxu0 0
    %245 = vmatprep.subr.bf16.mxu0 0
    %246 = vmatpush1.bf16.msra.mxu0 0
    %247 = vmatprep.subr.bf16.mxu0 0
    %248 = vmatpush1.bf16.msra.mxu0 0
    %249 = vmatprep.mubr.bf16.mxu0 0
    %250 = vmatmul.mubr.bf16.gmra.mrb[0].mxu0 %v174
    %v251 = vpop.f32.mrb[0].mxu0
    %v252 = vadd.f32 %v143, %v251
    %v253 = vpop.f32.mrb[0].mxu0
    %v254 = vadd.f32 %v147, %v253
    %v255 = vpop.f32.mrb[0].mxu0
    %v256 = vpop.f32.mrb[0].mxu0
    %257 = vdwg.mxu0
    %v258 = vmax.f32 %v211, 0.0
    %v259 = vmax.f32 %v213, 0.0
    %v260 = vmax.f32 %v252, 0.0
    %v261 = vmax.f32 %v254, 0.0
    %v262 = vpack.c.bf16 %v258, %v258
    %v263 = vpack.c.bf16 %v259, %v259
    %v264 = vpack.c.bf16 %v260, %v260
    %v265 = vpack.c.bf16 %v261, %v261
    %v266 = vld [vmem:[#allocation8] sm:$0xff]
    %v267 = vld [vmem:[#allocation8 + $0x8] sm:$0xf]
    %v268 = vld [vmem:[#allocation8 + $0xc] sm:$0xff]
    %v269 = vld [vmem:[#allocation8 + $0x14] sm:$0xf]
    %v270 = vld [vmem:[#allocation8 + $0x18] sm:$0xff]
    %v271 = vld [vmem:[#allocation8 + $0x20] sm:$0xf]
    %v272 = vld [vmem:[#allocation8 + $0x24] sm:$0xff]
    %v273 = vld [vmem:[#allocation8 + $0x2c] sm:$0xf]
    %v274 = vld [vmem:[#allocation8 + $0x30] sm:$0xff]
    %v275 = vld [vmem:[#allocation8 + $0x38] sm:$0xf]
    %v276 = vld [vmem:[#allocation8 + $0x3c] sm:$0xff]
    %v277 = vld [vmem:[#allocation8 + $0x44] sm:$0xf]
    %v278 = vld [vmem:[#allocation8 + $0x48] sm:$0xff]
    %v279 = vld [vmem:[#allocation8 + $0x50] sm:$0xf]
    %v280 = vld [vmem:[#allocation8 + $0x54] sm:$0xff]
    %v281 = vld [vmem:[#allocation8 + $0x5c] sm:$0xf]
    %v282 = vld [vmem:[#allocation8 + $0x60] sm:$0xff]
    %v283 = vld [vmem:[#allocation8 + $0x68] sm:$0xf]
    %v284 = vld [vmem:[#allocation8 + $0x6c] sm:$0xff]
    %v285 = vld [vmem:[#allocation8 + $0x74] sm:$0xf]
    %v286 = vld [vmem:[#allocation8 + $0x78] sm:$0xff]
    %v287 = vld [vmem:[#allocation8 + $0x80] sm:$0xf]
    %v288 = vld [vmem:[#allocation8 + $0x84] sm:$0xff]
    %v289 = vld [vmem:[#allocation8 + $0x8c] sm:$0xf]
    %v290 = vld [vmem:[#allocation8 + $0x90] sm:$0xff]
    %v291 = vld [vmem:[#allocation8 + $0x98] sm:$0xf]
    %v292 = vld [vmem:[#allocation8 + $0x9c] sm:$0xff]
    %v293 = vld [vmem:[#allocation8 + $0xa4] sm:$0xf]
    %v294 = vld [vmem:[#allocation8 + $0xa8] sm:$0xff]
    %v295 = vld [vmem:[#allocation8 + $0xb0] sm:$0xf]
    %v296 = vld [vmem:[#allocation8 + $0xb4] sm:$0xff]
    %v297 = vld [vmem:[#allocation8 + $0xbc] sm:$0xf]
    %v298 = vld [vmem:[#allocation8 + $0xc0] sm:$0xff]
    %v299 = vld [vmem:[#allocation8 + $0xc8] sm:$0xf]
    %v300 = vld [vmem:[#allocation8 + $0xcc] sm:$0xff]
    %v301 = vld [vmem:[#allocation8 + $0xd4] sm:$0xf]
    %v302 = vld [vmem:[#allocation8 + $0xd8] sm:$0xff]
    %v303 = vld [vmem:[#allocation8 + $0xe0] sm:$0xf]
    %v304 = vld [vmem:[#allocation8 + $0xe4] sm:$0xff]
    %v305 = vld [vmem:[#allocation8 + $0xec] sm:$0xf]
    %v306 = vld [vmem:[#allocation8 + $0xf0] sm:$0xff]
    %v307 = vld [vmem:[#allocation8 + $0xf8] sm:$0xf]
    %v308 = vld [vmem:[#allocation8 + $0xfc] sm:$0xff]
    %v309 = vld [vmem:[#allocation8 + $0x104] sm:$0xf]
    %v310 = vld [vmem:[#allocation8 + $0x108] sm:$0xff]
    %v311 = vld [vmem:[#allocation8 + $0x110] sm:$0xf]
    %v312 = vld [vmem:[#allocation8 + $0x114] sm:$0xff]
    %v313 = vld [vmem:[#allocation8 + $0x11c] sm:$0xf]
    %v314 = vld [vmem:[#allocation8 + $0x120] sm:$0xff]
    %v315 = vld [vmem:[#allocation8 + $0x128] sm:$0xf]
    %v316 = vld [vmem:[#allocation8 + $0x12c] sm:$0xff]
    %v317 = vld [vmem:[#allocation8 + $0x134] sm:$0xf]
    %v318 = vld [vmem:[#allocation8 + $0x138] sm:$0xff]
    %v319 = vld [vmem:[#allocation8 + $0x140] sm:$0xf]
    %v320 = vld [vmem:[#allocation8 + $0x144] sm:$0xff]
    %v321 = vld [vmem:[#allocation8 + $0x14c] sm:$0xf]
    %v322 = vld [vmem:[#allocation8 + $0x150] sm:$0xff]
    %v323 = vld [vmem:[#allocation8 + $0x158] sm:$0xf]
    %v324 = vld [vmem:[#allocation8 + $0x15c] sm:$0xff]
    %v325 = vld [vmem:[#allocation8 + $0x164] sm:$0xf]
    %v326 = vld [vmem:[#allocation8 + $0x168] sm:$0xff]
    %v327 = vld [vmem:[#allocation8 + $0x170] sm:$0xf]
    %v328 = vld [vmem:[#allocation8 + $0x174] sm:$0xff]
    %v329 = vld [vmem:[#allocation8 + $0x17c] sm:$0xf]
    %v330 = vld [vmem:[#allocation8 + $0x180] sm:$0xff]
    %v331 = vld [vmem:[#allocation8 + $0x188] sm:$0xf]
    %v332 = vld [vmem:[#allocation8 + $0x18c] sm:$0xff]
    %v333 = vld [vmem:[#allocation8 + $0x194] sm:$0xf]
    %v334 = vld [vmem:[#allocation8 + $0x198] sm:$0xff]
    %v335 = vld [vmem:[#allocation8 + $0x1a0] sm:$0xf]
    %v336 = vld [vmem:[#allocation8 + $0x1a4] sm:$0xff]
    %v337 = vld [vmem:[#allocation8 + $0x1ac] sm:$0xf]
    %v338 = vld [vmem:[#allocation8 + $0x1b0] sm:$0xff]
    %v339 = vld [vmem:[#allocation8 + $0x1b8] sm:$0xf]
    %v340 = vld [vmem:[#allocation8 + $0x1bc] sm:$0xff]
    %v341 = vld [vmem:[#allocation8 + $0x1c4] sm:$0xf]
    %v342 = vld [vmem:[#allocation8 + $0x1c8] sm:$0xff]
    %v343 = vld [vmem:[#allocation8 + $0x1d0] sm:$0xf]
    %v344 = vld [vmem:[#allocation8 + $0x1d4] sm:$0xff]
    %v345 = vld [vmem:[#allocation8 + $0x1dc] sm:$0xf]
    %v346 = vld [vmem:[#allocation8 + $0x1e0] sm:$0xff]
    %v347 = vld [vmem:[#allocation8 + $0x1e8] sm:$0xf]
    %v348 = vld [vmem:[#allocation8 + $0x1ec] sm:$0xff]
    %v349 = vld [vmem:[#allocation8 + $0x1f4] sm:$0xf]
    %v350 = vld [vmem:[#allocation8 + $0x1f8] sm:$0xff]
    %v351 = vld [vmem:[#allocation8 + $0x200] sm:$0xf]
    %v352 = vld [vmem:[#allocation8 + $0x204] sm:$0xff]
    %v353 = vld [vmem:[#allocation8 + $0x20c] sm:$0xf]
    %v354 = vld [vmem:[#allocation8 + $0x210] sm:$0xff]
    %v355 = vld [vmem:[#allocation8 + $0x218] sm:$0xf]
    %v356 = vld [vmem:[#allocation8 + $0x21c] sm:$0xff]
    %v357 = vld [vmem:[#allocation8 + $0x224] sm:$0xf]
    %v358 = vld [vmem:[#allocation8 + $0x228] sm:$0xff]
    %v359 = vld [vmem:[#allocation8 + $0x230] sm:$0xf]
    %v360 = vld [vmem:[#allocation8 + $0x234] sm:$0xff]
    %v361 = vld [vmem:[#allocation8 + $0x23c] sm:$0xf]
    %v362 = vld [vmem:[#allocation8 + $0x240] sm:$0xff]
    %v363 = vld [vmem:[#allocation8 + $0x248] sm:$0xf]
    %v364 = vld [vmem:[#allocation8 + $0x24c] sm:$0xff]
    %v365 = vld [vmem:[#allocation8 + $0x254] sm:$0xf]
    %v366 = vld [vmem:[#allocation8 + $0x258] sm:$0xff]
    %v367 = vld [vmem:[#allocation8 + $0x260] sm:$0xf]
    %v368 = vld [vmem:[#allocation8 + $0x264] sm:$0xff]
    %v369 = vld [vmem:[#allocation8 + $0x26c] sm:$0xf]
    %v370 = vld [vmem:[#allocation8 + $0x270] sm:$0xff]
    %v371 = vld [vmem:[#allocation8 + $0x278] sm:$0xf]
    %v372 = vld [vmem:[#allocation8 + $0x27c] sm:$0xff]
    %v373 = vld [vmem:[#allocation8 + $0x284] sm:$0xf]
    %v374 = vld [vmem:[#allocation8 + $0x288] sm:$0xff]
    %v375 = vld [vmem:[#allocation8 + $0x290] sm:$0xf]
    %v376 = vld [vmem:[#allocation8 + $0x294] sm:$0xff]
    %v377 = vld [vmem:[#allocation8 + $0x29c] sm:$0xf]
    %v378 = vld [vmem:[#allocation8 + $0x2a0] sm:$0xff]
    %v379 = vld [vmem:[#allocation8 + $0x2a8] sm:$0xf]
    %v380 = vld [vmem:[#allocation8 + $0x2ac] sm:$0xff]
    %v381 = vld [vmem:[#allocation8 + $0x2b4] sm:$0xf]
    %v382 = vld [vmem:[#allocation8 + $0x2b8] sm:$0xff]
    %v383 = vld [vmem:[#allocation8 + $0x2c0] sm:$0xf]
    %v384 = vld [vmem:[#allocation8 + $0x2c4] sm:$0xff]
    %v385 = vld [vmem:[#allocation8 + $0x2cc] sm:$0xf]
    %v386 = vld [vmem:[#allocation8 + $0x2d0] sm:$0xff]
    %v387 = vld [vmem:[#allocation8 + $0x2d8] sm:$0xf]
    %v388 = vld [vmem:[#allocation8 + $0x2dc] sm:$0xff]
    %v389 = vld [vmem:[#allocation8 + $0x2e4] sm:$0xf]
    %v390 = vld [vmem:[#allocation8 + $0x2e8] sm:$0xff]
    %v391 = vld [vmem:[#allocation8 + $0x2f0] sm:$0xf]
    %v392 = vld [vmem:[#allocation8 + $0x2f4] sm:$0xff]
    %v393 = vld [vmem:[#allocation8 + $0x2fc] sm:$0xf]
    %v394 = vld [vmem:[%s5] sm:$0x7]
    %v396 = vlaneseq
    %v397 = vshrl.u32 %v396, 7
    %v398 = vsub.s32 0, %v397
    %v399 = vrot.slane %v394, %v398
    %v400 = vlaneseq
    %v401 = vshrl.u32 %v400, 7
    %v402 = vsub.s32 1, %v401
    %v403 = vrot.slane %v394, %v402
    %v404 = vlaneseq
    %v405 = vshrl.u32 %v404, 7
    %v406 = vsub.s32 2, %v405
    %v407 = vrot.slane %v394, %v406
    %v539 = vunpack.c.l.b16 %v266
    %v540 = vunpack.c.h.b16 %v266
    %v541 = vunpack.c.l.b16 %v267
    %v542 = vunpack.c.l.b16 %v268
    %v543 = vunpack.c.h.b16 %v268
    %v544 = vunpack.c.l.b16 %v269
    %v545 = vunpack.c.l.b16 %v270
    %v546 = vunpack.c.h.b16 %v270
    %v547 = vunpack.c.l.b16 %v271
    %v548 = vunpack.c.l.b16 %v272
    %v549 = vunpack.c.h.b16 %v272
    %v550 = vunpack.c.l.b16 %v273
    %v551 = vunpack.c.l.b16 %v274
    %v552 = vunpack.c.h.b16 %v274
    %v553 = vunpack.c.l.b16 %v275
    %v554 = vunpack.c.l.b16 %v276
    %v555 = vunpack.c.h.b16 %v276
    %v556 = vunpack.c.l.b16 %v277
    %v557 = vunpack.c.l.b16 %v278
    %v558 = vunpack.c.h.b16 %v278
    %v559 = vunpack.c.l.b16 %v279
    %v560 = vunpack.c.l.b16 %v280
    %v561 = vunpack.c.h.b16 %v280
    %v562 = vunpack.c.l.b16 %v281
    %v563 = vunpack.c.l.b16 %v282
    %v564 = vunpack.c.h.b16 %v282
    %v565 = vunpack.c.l.b16 %v283
    %v566 = vunpack.c.l.b16 %v284
    %v567 = vunpack.c.h.b16 %v284
    %v568 = vunpack.c.l.b16 %v285
    %v569 = vunpack.c.l.b16 %v286
    %v570 = vunpack.c.h.b16 %v286
    %v571 = vunpack.c.l.b16 %v287
    %v572 = vunpack.c.l.b16 %v288
    %v573 = vunpack.c.h.b16 %v288
    %v574 = vunpack.c.l.b16 %v289
    %v575 = vunpack.c.l.b16 %v290
    %v576 = vunpack.c.h.b16 %v290
    %v577 = vunpack.c.l.b16 %v291
    %v578 = vunpack.c.l.b16 %v292
    %v579 = vunpack.c.h.b16 %v292
    %v580 = vunpack.c.l.b16 %v293
    %v581 = vunpack.c.l.b16 %v294
    %v582 = vunpack.c.h.b16 %v294
    %v583 = vunpack.c.l.b16 %v295
    %v584 = vunpack.c.l.b16 %v296
    %v585 = vunpack.c.h.b16 %v296
    %v586 = vunpack.c.l.b16 %v297
    %v587 = vunpack.c.l.b16 %v298
    %v588 = vunpack.c.h.b16 %v298
    %v589 = vunpack.c.l.b16 %v299
    %v590 = vunpack.c.l.b16 %v300
    %v591 = vunpack.c.h.b16 %v300
    %v592 = vunpack.c.l.b16 %v301
    %v593 = vunpack.c.l.b16 %v302
    %v594 = vunpack.c.h.b16 %v302
    %v595 = vunpack.c.l.b16 %v303
    %v596 = vunpack.c.l.b16 %v304
    %v597 = vunpack.c.h.b16 %v304
    %v598 = vunpack.c.l.b16 %v305
    %v599 = vunpack.c.l.b16 %v306
    %v600 = vunpack.c.h.b16 %v306
    %v601 = vunpack.c.l.b16 %v307
    %v602 = vunpack.c.l.b16 %v308
    %v603 = vunpack.c.h.b16 %v308
    %v604 = vunpack.c.l.b16 %v309
    %v605 = vunpack.c.l.b16 %v310
    %v606 = vunpack.c.h.b16 %v310
    %v607 = vunpack.c.l.b16 %v311
    %v608 = vunpack.c.l.b16 %v312
    %v609 = vunpack.c.h.b16 %v312
    %v610 = vunpack.c.l.b16 %v313
    %v611 = vunpack.c.l.b16 %v314
    %v612 = vunpack.c.h.b16 %v314
    %v613 = vunpack.c.l.b16 %v315
    %v614 = vunpack.c.l.b16 %v316
    %v615 = vunpack.c.h.b16 %v316
    %v616 = vunpack.c.l.b16 %v317
    %v617 = vunpack.c.l.b16 %v318
    %v618 = vunpack.c.h.b16 %v318
    %v619 = vunpack.c.l.b16 %v319
    %v620 = vunpack.c.l.b16 %v320
    %v621 = vunpack.c.h.b16 %v320
    %v622 = vunpack.c.l.b16 %v321
    %v623 = vunpack.c.l.b16 %v322
    %v624 = vunpack.c.h.b16 %v322
    %v625 = vunpack.c.l.b16 %v323
    %v626 = vunpack.c.l.b16 %v324
    %v627 = vunpack.c.h.b16 %v324
    %v628 = vunpack.c.l.b16 %v325
    %v629 = vunpack.c.l.b16 %v326
    %v630 = vunpack.c.h.b16 %v326
    %v631 = vunpack.c.l.b16 %v327
    %v632 = vunpack.c.l.b16 %v328
    %v633 = vunpack.c.h.b16 %v328
    %v634 = vunpack.c.l.b16 %v329
    %v635 = vunpack.c.l.b16 %v330
    %v636 = vunpack.c.h.b16 %v330
    %v637 = vunpack.c.l.b16 %v331
    %v638 = vunpack.c.l.b16 %v332
    %v639 = vunpack.c.h.b16 %v332
    %v640 = vunpack.c.l.b16 %v333
    %v641 = vunpack.c.l.b16 %v334
    %v642 = vunpack.c.h.b16 %v334
    %v643 = vunpack.c.l.b16 %v335
    %v644 = vunpack.c.l.b16 %v336
    %v645 = vunpack.c.h.b16 %v336
    %v646 = vunpack.c.l.b16 %v337
    %v647 = vunpack.c.l.b16 %v338
    %v648 = vunpack.c.h.b16 %v338
    %v649 = vunpack.c.l.b16 %v339
    %v650 = vunpack.c.l.b16 %v340
    %v651 = vunpack.c.h.b16 %v340
    %v652 = vunpack.c.l.b16 %v341
    %v653 = vunpack.c.l.b16 %v342
    %v654 = vunpack.c.h.b16 %v342
    %v655 = vunpack.c.l.b16 %v343
    %v656 = vunpack.c.l.b16 %v344
    %v657 = vunpack.c.h.b16 %v344
    %v658 = vunpack.c.l.b16 %v345
    %v659 = vunpack.c.l.b16 %v346
    %v660 = vunpack.c.h.b16 %v346
    %v661 = vunpack.c.l.b16 %v347
    %v662 = vunpack.c.l.b16 %v348
    %v663 = vunpack.c.h.b16 %v348
    %v664 = vunpack.c.l.b16 %v349
    %v665 = vunpack.c.l.b16 %v350
    %v666 = vunpack.c.h.b16 %v350
    %v667 = vunpack.c.l.b16 %v351
    %v668 = vunpack.c.l.b16 %v352
    %v669 = vunpack.c.h.b16 %v352
    %v670 = vunpack.c.l.b16 %v353
    %v671 = vunpack.c.l.b16 %v354
    %v672 = vunpack.c.h.b16 %v354
    %v673 = vunpack.c.l.b16 %v355
    %v674 = vunpack.c.l.b16 %v356
    %v675 = vunpack.c.h.b16 %v356
    %v676 = vunpack.c.l.b16 %v357
    %v677 = vunpack.c.l.b16 %v358
    %v678 = vunpack.c.h.b16 %v358
    %v679 = vunpack.c.l.b16 %v359
    %v680 = vunpack.c.l.b16 %v360
    %v681 = vunpack.c.h.b16 %v360
    %v682 = vunpack.c.l.b16 %v361
    %v683 = vunpack.c.l.b16 %v362
    %v684 = vunpack.c.h.b16 %v362
    %v685 = vunpack.c.l.b16 %v363
    %v686 = vunpack.c.l.b16 %v364
    %v687 = vunpack.c.h.b16 %v364
    %v688 = vunpack.c.l.b16 %v365
    %v689 = vunpack.c.l.b16 %v366
    %v690 = vunpack.c.h.b16 %v366
    %v691 = vunpack.c.l.b16 %v367
    %v692 = vunpack.c.l.b16 %v368
    %v693 = vunpack.c.h.b16 %v368
    %v694 = vunpack.c.l.b16 %v369
    %v695 = vunpack.c.l.b16 %v370
    %v696 = vunpack.c.h.b16 %v370
    %v697 = vunpack.c.l.b16 %v371
    %v698 = vunpack.c.l.b16 %v372
    %v699 = vunpack.c.h.b16 %v372
    %v700 = vunpack.c.l.b16 %v373
    %v701 = vunpack.c.l.b16 %v374
    %v702 = vunpack.c.h.b16 %v374
    %v703 = vunpack.c.l.b16 %v375
    %v704 = vunpack.c.l.b16 %v376
    %v705 = vunpack.c.h.b16 %v376
    %v706 = vunpack.c.l.b16 %v377
    %v707 = vunpack.c.l.b16 %v378
    %v708 = vunpack.c.h.b16 %v378
    %v709 = vunpack.c.l.b16 %v379
    %v710 = vunpack.c.l.b16 %v380
    %v711 = vunpack.c.h.b16 %v380
    %v712 = vunpack.c.l.b16 %v381
    %v713 = vunpack.c.l.b16 %v382
    %v714 = vunpack.c.h.b16 %v382
    %v715 = vunpack.c.l.b16 %v383
    %v716 = vunpack.c.l.b16 %v384
    %v717 = vunpack.c.h.b16 %v384
    %v718 = vunpack.c.l.b16 %v385
    %v719 = vunpack.c.l.b16 %v386
    %v720 = vunpack.c.h.b16 %v386
    %v721 = vunpack.c.l.b16 %v387
    %v722 = vunpack.c.l.b16 %v388
    %v723 = vunpack.c.h.b16 %v388
    %v724 = vunpack.c.l.b16 %v389
    %v725 = vunpack.c.l.b16 %v390
    %v726 = vunpack.c.h.b16 %v390
    %v727 = vunpack.c.l.b16 %v391
    %v728 = vunpack.c.l.b16 %v392
    %v729 = vunpack.c.h.b16 %v392
    %v730 = vunpack.c.l.b16 %v393
    %v731 = vpack.c.b16 %v542, %v539
    %v732 = vpack.c.b16 %v543, %v540
    %v733 = vpack.c.b16 %v544, %v541
    %v734 = vpack.c.b16 %v548, %v545
    %v735 = vpack.c.b16 %v549, %v546
    %v736 = vpack.c.b16 %v550, %v547
    %v737 = vpack.c.b16 %v554, %v551
    %v738 = vpack.c.b16 %v555, %v552
    %v739 = vpack.c.b16 %v556, %v553
    %v740 = vpack.c.b16 %v560, %v557
    %v741 = vpack.c.b16 %v561, %v558
    %v742 = vpack.c.b16 %v562, %v559
    %v743 = vpack.c.b16 %v566, %v563
    %v744 = vpack.c.b16 %v567, %v564
    %v745 = vpack.c.b16 %v568, %v565
    %v746 = vpack.c.b16 %v572, %v569
    %v747 = vpack.c.b16 %v573, %v570
    %v748 = vpack.c.b16 %v574, %v571
    %v749 = vpack.c.b16 %v578, %v575
    %v750 = vpack.c.b16 %v579, %v576
    %v751 = vpack.c.b16 %v580, %v577
    %v752 = vpack.c.b16 %v584, %v581
    %v753 = vpack.c.b16 %v585, %v582
    %v754 = vpack.c.b16 %v586, %v583
    %v755 = vpack.c.b16 %v590, %v587
    %v756 = vpack.c.b16 %v591, %v588
    %v757 = vpack.c.b16 %v592, %v589
    %v758 = vpack.c.b16 %v596, %v593
    %v759 = vpack.c.b16 %v597, %v594
    %v760 = vpack.c.b16 %v598, %v595
    %v761 = vpack.c.b16 %v602, %v599
    %v762 = vpack.c.b16 %v603, %v600
    %v763 = vpack.c.b16 %v604, %v601
    %v764 = vpack.c.b16 %v608, %v605
    %v765 = vpack.c.b16 %v609, %v606
    %v766 = vpack.c.b16 %v610, %v607
    %v767 = vpack.c.b16 %v614, %v611
    %v768 = vpack.c.b16 %v615, %v612
    %v769 = vpack.c.b16 %v616, %v613
    %v770 = vpack.c.b16 %v620, %v617
    %v771 = vpack.c.b16 %v621, %v618
    %v772 = vpack.c.b16 %v622, %v619
    %v773 = vpack.c.b16 %v626, %v623
    %v774 = vpack.c.b16 %v627, %v624
    %v775 = vpack.c.b16 %v628, %v625
    %v776 = vpack.c.b16 %v632, %v629
    %v777 = vpack.c.b16 %v633, %v630
    %v778 = vpack.c.b16 %v634, %v631
    %v779 = vpack.c.b16 %v638, %v635
    %v780 = vpack.c.b16 %v639, %v636
    %v781 = vpack.c.b16 %v640, %v637
    %v782 = vpack.c.b16 %v644, %v641
    %v783 = vpack.c.b16 %v645, %v642
    %v784 = vpack.c.b16 %v646, %v643
    %v785 = vpack.c.b16 %v650, %v647
    %v786 = vpack.c.b16 %v651, %v648
    %v787 = vpack.c.b16 %v652, %v649
    %v788 = vpack.c.b16 %v656, %v653
    %v789 = vpack.c.b16 %v657, %v654
    %v790 = vpack.c.b16 %v658, %v655
    %v791 = vpack.c.b16 %v662, %v659
    %v792 = vpack.c.b16 %v663, %v660
    %v793 = vpack.c.b16 %v664, %v661
    %v794 = vpack.c.b16 %v668, %v665
    %v795 = vpack.c.b16 %v669, %v666
    %v796 = vpack.c.b16 %v670, %v667
    %v797 = vpack.c.b16 %v674, %v671
    %v798 = vpack.c.b16 %v675, %v672
    %v799 = vpack.c.b16 %v676, %v673
    %v800 = vpack.c.b16 %v680, %v677
    %v801 = vpack.c.b16 %v681, %v678
    %v802 = vpack.c.b16 %v682, %v679
    %v803 = vpack.c.b16 %v686, %v683
    %v804 = vpack.c.b16 %v687, %v684
    %v805 = vpack.c.b16 %v688, %v685
    %v806 = vpack.c.b16 %v692, %v689
    %v807 = vpack.c.b16 %v693, %v690
    %v808 = vpack.c.b16 %v694, %v691
    %v809 = vpack.c.b16 %v698, %v695
    %v810 = vpack.c.b16 %v699, %v696
    %v811 = vpack.c.b16 %v700, %v697
    %v812 = vpack.c.b16 %v704, %v701
    %v813 = vpack.c.b16 %v705, %v702
    %v814 = vpack.c.b16 %v706, %v703
    %v815 = vpack.c.b16 %v710, %v707
    %v816 = vpack.c.b16 %v711, %v708
    %v817 = vpack.c.b16 %v712, %v709
    %v818 = vpack.c.b16 %v716, %v713
    %v819 = vpack.c.b16 %v717, %v714
    %v820 = vpack.c.b16 %v718, %v715
    %v821 = vpack.c.b16 %v722, %v719
    %v822 = vpack.c.b16 %v723, %v720
    %v823 = vpack.c.b16 %v724, %v721
    %v824 = vpack.c.b16 %v728, %v725
    %v825 = vpack.c.b16 %v729, %v726
    %v826 = vpack.c.b16 %v730, %v727
    %923 = vmatprep.subr.bf16.mxu0 %v732
    %924 = vmatpush1.bf16.msra.mxu0 %v731
    %925 = vmatprep.subr.bf16.mxu0 %v735
    %926 = vmatpush1.bf16.msra.mxu0 %v734
    %927 = vmatprep.subr.bf16.mxu0 %v738
    %928 = vmatpush1.bf16.msra.mxu0 %v737
    %929 = vmatprep.subr.bf16.mxu0 %v741
    %930 = vmatpush1.bf16.msra.mxu0 %v740
    %931 = vmatprep.subr.bf16.mxu0 %v744
    %932 = vmatpush1.bf16.msra.mxu0 %v743
    %933 = vmatprep.subr.bf16.mxu0 %v747
    %934 = vmatpush1.bf16.msra.mxu0 %v746
    %935 = vmatprep.subr.bf16.mxu0 %v750
    %936 = vmatpush1.bf16.msra.mxu0 %v749
    %937 = vmatprep.subr.bf16.mxu0 %v753
    %938 = vmatpush1.bf16.msra.mxu0 %v752
    %939 = vmatprep.subr.bf16.mxu0 %v756
    %940 = vmatpush1.bf16.msra.mxu0 %v755
    %941 = vmatprep.subr.bf16.mxu0 %v759
    %942 = vmatpush1.bf16.msra.mxu0 %v758
    %943 = vmatprep.subr.bf16.mxu0 %v762
    %944 = vmatpush1.bf16.msra.mxu0 %v761
    %945 = vmatprep.subr.bf16.mxu0 %v765
    %946 = vmatpush1.bf16.msra.mxu0 %v764
    %947 = vmatprep.subr.bf16.mxu0 %v768
    %948 = vmatpush1.bf16.msra.mxu0 %v767
    %949 = vmatprep.subr.bf16.mxu0 %v771
    %950 = vmatpush1.bf16.msra.mxu0 %v770
    %951 = vmatprep.subr.bf16.mxu0 %v774
    %952 = vmatpush1.bf16.msra.mxu0 %v773
    %953 = vmatprep.subr.bf16.mxu0 %v777
    %954 = vmatpush1.bf16.msra.mxu0 %v776
    %955 = vmatprep.mubr.bf16.mxu0 %v263
    %956 = vmatmul.mubr.bf16.gmra.mrb[0].mxu0 %v262
    %v957 = vpop.f32.mrb[0].mxu0
    %v958 = vadd.f32 %v399, %v957
    %v959 = vpop.f32.mrb[0].mxu0
    %v960 = vadd.f32 %v403, %v959
    %v961 = vpop.f32.mrb[0].mxu0
    %v962 = vpop.f32.mrb[0].mxu0
    %963 = vdwg.mxu0
    %964 = vmatprep.subr.bf16.mxu0 %v780
    %965 = vmatpush1.bf16.msra.mxu0 %v779
    %966 = vmatprep.subr.bf16.mxu0 %v783
    %967 = vmatpush1.bf16.msra.mxu0 %v782
    %968 = vmatprep.subr.bf16.mxu0 %v786
    %969 = vmatpush1.bf16.msra.mxu0 %v785
    %970 = vmatprep.subr.bf16.mxu0 %v789
    %971 = vmatpush1.bf16.msra.mxu0 %v788
    %972 = vmatprep.subr.bf16.mxu0 %v792
    %973 = vmatpush1.bf16.msra.mxu0 %v791
    %974 = vmatprep.subr.bf16.mxu0 %v795
    %975 = vmatpush1.bf16.msra.mxu0 %v794
    %976 = vmatprep.subr.bf16.mxu0 %v798
    %977 = vmatpush1.bf16.msra.mxu0 %v797
    %978 = vmatprep.subr.bf16.mxu0 %v801
    %979 = vmatpush1.bf16.msra.mxu0 %v800
    %980 = vmatprep.subr.bf16.mxu0 %v804
    %981 = vmatpush1.bf16.msra.mxu0 %v803
    %982 = vmatprep.subr.bf16.mxu0 %v807
    %983 = vmatpush1.bf16.msra.mxu0 %v806
    %984 = vmatprep.subr.bf16.mxu0 %v810
    %985 = vmatpush1.bf16.msra.mxu0 %v809
    %986 = vmatprep.subr.bf16.mxu0 %v813
    %987 = vmatpush1.bf16.msra.mxu0 %v812
    %988 = vmatprep.subr.bf16.mxu0 %v816
    %989 = vmatpush1.bf16.msra.mxu0 %v815
    %990 = vmatprep.subr.bf16.mxu0 %v819
    %991 = vmatpush1.bf16.msra.mxu0 %v818
    %992 = vmatprep.subr.bf16.mxu0 %v822
    %993 = vmatpush1.bf16.msra.mxu0 %v821
    %994 = vmatprep.subr.bf16.mxu0 %v825
    %995 = vmatpush1.bf16.msra.mxu0 %v824
    %996 = vmatprep.mubr.bf16.mxu0 %v265
    %997 = vmatmul.mubr.bf16.gmra.mrb[0].mxu0 %v264
    %v998 = vpop.f32.mrb[0].mxu0
    %v999 = vadd.f32 %v958, %v998
    %v1000 = vpop.f32.mrb[0].mxu0
    %v1001 = vadd.f32 %v960, %v1000
    %v1002 = vpop.f32.mrb[0].mxu0
    %v1003 = vpop.f32.mrb[0].mxu0
    %1004 = vdwg.mxu0
    %1005 = vmatprep.subr.bf16.mxu0 0
    %1006 = vmatpush1.bf16.msra.mxu0 %v733
    %1007 = vmatprep.subr.bf16.mxu0 0
    %1008 = vmatpush1.bf16.msra.mxu0 %v736
    %1009 = vmatprep.subr.bf16.mxu0 0
    %1010 = vmatpush1.bf16.msra.mxu0 %v739
    %1011 = vmatprep.subr.bf16.mxu0 0
    %1012 = vmatpush1.bf16.msra.mxu0 %v742
    %1013 = vmatprep.subr.bf16.mxu0 0
    %1014 = vmatpush1.bf16.msra.mxu0 %v745
    %1015 = vmatprep.subr.bf16.mxu0 0
    %1016 = vmatpush1.bf16.msra.mxu0 %v748
    %1017 = vmatprep.subr.bf16.mxu0 0
    %1018 = vmatpush1.bf16.msra.mxu0 %v751
    %1019 = vmatprep.subr.bf16.mxu0 0
    %1020 = vmatpush1.bf16.msra.mxu0 %v754
    %1021 = vmatprep.subr.bf16.mxu0 0
    %1022 = vmatpush1.bf16.msra.mxu0 %v757
    %1023 = vmatprep.subr.bf16.mxu0 0
    %1024 = vmatpush1.bf16.msra.mxu0 %v760
    %1025 = vmatprep.subr.bf16.mxu0 0
    %1026 = vmatpush1.bf16.msra.mxu0 %v763
    %1027 = vmatprep.subr.bf16.mxu0 0
    %1028 = vmatpush1.bf16.msra.mxu0 %v766
    %1029 = vmatprep.subr.bf16.mxu0 0
    %1030 = vmatpush1.bf16.msra.mxu0 %v769
    %1031 = vmatprep.subr.bf16.mxu0 0
    %1032 = vmatpush1.bf16.msra.mxu0 %v772
    %1033 = vmatprep.subr.bf16.mxu0 0
    %1034 = vmatpush1.bf16.msra.mxu0 %v775
    %1035 = vmatprep.subr.bf16.mxu0 0
    %1036 = vmatpush1.bf16.msra.mxu0 %v778
    %1037 = vmatprep.mubr.bf16.mxu0 %v263
    %1038 = vmatmul.mubr.bf16.gmra.mrb[0].mxu0 %v262
    %v1039 = vpop.f32.mrb[0].mxu0
    %v1040 = vadd.f32 %v407, %v1039
    %v1041 = vpop.f32.mrb[0].mxu0
    %v1042 = vpop.f32.mrb[0].mxu0
    %v1043 = vpop.f32.mrb[0].mxu0
    %1044 = vdwg.mxu0
    %1045 = vmatprep.subr.bf16.mxu0 0
    %1046 = vmatpush1.bf16.msra.mxu0 %v781
    %1047 = vmatprep.subr.bf16.mxu0 0
    %1048 = vmatpush1.bf16.msra.mxu0 %v784
    %1049 = vmatprep.subr.bf16.mxu0 0
    %1050 = vmatpush1.bf16.msra.mxu0 %v787
    %1051 = vmatprep.subr.bf16.mxu0 0
    %1052 = vmatpush1.bf16.msra.mxu0 %v790
    %1053 = vmatprep.subr.bf16.mxu0 0
    %1054 = vmatpush1.bf16.msra.mxu0 %v793
    %1055 = vmatprep.subr.bf16.mxu0 0
    %1056 = vmatpush1.bf16.msra.mxu0 %v796
    %1057 = vmatprep.subr.bf16.mxu0 0
    %1058 = vmatpush1.bf16.msra.mxu0 %v799
    %1059 = vmatprep.subr.bf16.mxu0 0
    %1060 = vmatpush1.bf16.msra.mxu0 %v802
    %1061 = vmatprep.subr.bf16.mxu0 0
    %1062 = vmatpush1.bf16.msra.mxu0 %v805
    %1063 = vmatprep.subr.bf16.mxu0 0
    %1064 = vmatpush1.bf16.msra.mxu0 %v808
    %1065 = vmatprep.subr.bf16.mxu0 0
    %1066 = vmatpush1.bf16.msra.mxu0 %v811
    %1067 = vmatprep.subr.bf16.mxu0 0
    %1068 = vmatpush1.bf16.msra.mxu0 %v814
    %1069 = vmatprep.subr.bf16.mxu0 0
    %1070 = vmatpush1.bf16.msra.mxu0 %v817
    %1071 = vmatprep.subr.bf16.mxu0 0
    %1072 = vmatpush1.bf16.msra.mxu0 %v820
    %1073 = vmatprep.subr.bf16.mxu0 0
    %1074 = vmatpush1.bf16.msra.mxu0 %v823
    %1075 = vmatprep.subr.bf16.mxu0 0
    %1076 = vmatpush1.bf16.msra.mxu0 %v826
    %1077 = vmatprep.mubr.bf16.mxu0 %v265
    %1078 = vmatmul.mubr.bf16.gmra.mrb[0].mxu0 %v264
    %v1079 = vpop.f32.mrb[0].mxu0
    %v1080 = vadd.f32 %v1040, %v1079
    %v1081 = vpop.f32.mrb[0].mxu0
    %v1082 = vpop.f32.mrb[0].mxu0
    %v1083 = vpop.f32.mrb[0].mxu0
    %1084 = vdwg.mxu0
    %v1085 = vmax.f32 %v999, 0.0
    %v1086 = vmax.f32 %v1001, 0.0
    %v1087 = vmax.f32 %v1080, 0.0
    %v1088 = vld [vmem:[#allocation5] sm:$0xff]
    %v1089 = vpack.c.bf16 %v1088, %v1088
    %v1090 = vld [vmem:[%s6] sm:$0xff]
    %v1091 = vld [vmem:[%s6 + $0x8] sm:$0xf]
    %v1092 = vld [vmem:[%s7] sm:$0x7]
    %v1094 = vlaneseq
    %v1095 = vshrl.u32 %v1094, 7
    %v1096 = vsub.s32 0, %v1095
    %v1097 = vrot.slane %v1092, %v1096
    %v1098 = vlaneseq
    %v1099 = vshrl.u32 %v1098, 7
    %v1100 = vsub.s32 1, %v1099
    %v1101 = vrot.slane %v1092, %v1100
    %v1102 = vlaneseq
    %v1103 = vshrl.u32 %v1102, 7
    %v1104 = vsub.s32 2, %v1103
    %v1105 = vrot.slane %v1092, %v1104
    %v1111 = vunpack.c.l.b16 %v1090
    %v1112 = vunpack.c.h.b16 %v1090
    %v1113 = vunpack.c.l.b16 %v1091
    %v1114 = vpack.c.b16 %v1111, %v1111
    %v1115 = vpack.c.b16 %v1112, %v1112
    %v1116 = vpack.c.b16 %v1113, %v1113
    %vm1117 = vcmask 64512
    %v1119 = vsel %vm1117, %v1089, 0
    %vm1121 = vcmask 1043456
    %v1123 = vsel %vm1121, %v1114, 0
    %v1126 = vsel %vm1121, %v1115, 0
    %v1129 = vsel %vm1121, %v1116, 0
    %1131 = vmatprep.subr.bf16.mxu0 %v1126
    %1132 = vmatpush1.bf16.msra.mxu0 %v1123
    %1133 = vmatprep.subr.bf16.mxu0 0
    %1134 = vmatpush1.bf16.msra.mxu0 0
    %1135 = vmatprep.subr.bf16.mxu0 0
    %1136 = vmatpush1.bf16.msra.mxu0 0
    %1137 = vmatprep.subr.bf16.mxu0 0
    %1138 = vmatpush1.bf16.msra.mxu0 0
    %1139 = vmatprep.subr.bf16.mxu0 0
    %1140 = vmatpush1.bf16.msra.mxu0 0
    %1141 = vmatprep.subr.bf16.mxu0 0
    %1142 = vmatpush1.bf16.msra.mxu0 0
    %1143 = vmatprep.subr.bf16.mxu0 0
    %1144 = vmatpush1.bf16.msra.mxu0 0
    %1145 = vmatprep.subr.bf16.mxu0 0
    %1146 = vmatpush1.bf16.msra.mxu0 0
    %1147 = vmatprep.subr.bf16.mxu0 0
    %1148 = vmatpush1.bf16.msra.mxu0 0
    %1149 = vmatprep.subr.bf16.mxu0 0
    %1150 = vmatpush1.bf16.msra.mxu0 0
    %1151 = vmatprep.subr.bf16.mxu0 0
    %1152 = vmatpush1.bf16.msra.mxu0 0
    %1153 = vmatprep.subr.bf16.mxu0 0
    %1154 = vmatpush1.bf16.msra.mxu0 0
    %1155 = vmatprep.subr.bf16.mxu0 0
    %1156 = vmatpush1.bf16.msra.mxu0 0
    %1157 = vmatprep.subr.bf16.mxu0 0
    %1158 = vmatpush1.bf16.msra.mxu0 0
    %1159 = vmatprep.subr.bf16.mxu0 0
    %1160 = vmatpush1.bf16.msra.mxu0 0
    %1161 = vmatprep.subr.bf16.mxu0 0
    %1162 = vmatpush1.bf16.msra.mxu0 0
    %1163 = vmatprep.mubr.bf16.mxu0 0
    %1164 = vmatmul.mubr.bf16.gmra.mrb[0].mxu0 %v1119
    %v1165 = vpop.f32.mrb[0].mxu0
    %v1166 = vadd.f32 %v1097, %v1165
    %v1167 = vpop.f32.mrb[0].mxu0
    %v1168 = vadd.f32 %v1101, %v1167
    %v1169 = vpop.f32.mrb[0].mxu0
    %v1170 = vpop.f32.mrb[0].mxu0
    %1171 = vdwg.mxu0
    %1172 = vmatprep.subr.bf16.mxu0 0
    %1173 = vmatpush1.bf16.msra.mxu0 %v1129
    %1174 = vmatprep.subr.bf16.mxu0 0
    %1175 = vmatpush1.bf16.msra.mxu0 0
    %1176 = vmatprep.subr.bf16.mxu0 0
    %1177 = vmatpush1.bf16.msra.mxu0 0
    %1178 = vmatprep.subr.bf16.mxu0 0
    %1179 = vmatpush1.bf16.msra.mxu0 0
    %1180 = vmatprep.subr.bf16.mxu0 0
    %1181 = vmatpush1.bf16.msra.mxu0 0
    %1182 = vmatprep.subr.bf16.mxu0 0
    %1183 = vmatpush1.bf16.msra.mxu0 0
    %1184 = vmatprep.subr.bf16.mxu0 0
    %1185 = vmatpush1.bf16.msra.mxu0 0
    %1186 = vmatprep.subr.bf16.mxu0 0
    %1187 = vmatpush1.bf16.msra.mxu0 0
    %1188 = vmatprep.subr.bf16.mxu0 0
    %1189 = vmatpush1.bf16.msra.mxu0 0
    %1190 = vmatprep.subr.bf16.mxu0 0
    %1191 = vmatpush1.bf16.msra.mxu0 0
    %1192 = vmatprep.subr.bf16.mxu0 0
    %1193 = vmatpush1.bf16.msra.mxu0 0
    %1194 = vmatprep.subr.bf16.mxu0 0
    %1195 = vmatpush1.bf16.msra.mxu0 0
    %1196 = vmatprep.subr.bf16.mxu0 0
    %1197 = vmatpush1.bf16.msra.mxu0 0
    %1198 = vmatprep.subr.bf16.mxu0 0
    %1199 = vmatpush1.bf16.msra.mxu0 0
    %1200 = vmatprep.subr.bf16.mxu0 0
    %1201 = vmatpush1.bf16.msra.mxu0 0
    %1202 = vmatprep.subr.bf16.mxu0 0
    %1203 = vmatpush1.bf16.msra.mxu0 0
    %1204 = vmatprep.mubr.bf16.mxu0 0
    %1205 = vmatmul.mubr.bf16.gmra.mrb[0].mxu0 %v1119
    %v1206 = vpop.f32.mrb[0].mxu0
    %v1207 = vadd.f32 %v1105, %v1206
    %v1208 = vpop.f32.mrb[0].mxu0
    %v1209 = vpop.f32.mrb[0].mxu0
    %v1210 = vpop.f32.mrb[0].mxu0
    %1211 = vdwg.mxu0
    %v1212 = vmax.f32 %v1166, 0.0
    %v1213 = vmax.f32 %v1168, 0.0
    %v1214 = vmax.f32 %v1207, 0.0
    %v1215 = vpack.c.bf16 %v1085, %v1085
    %v1216 = vpack.c.bf16 %v1086, %v1086
    %v1217 = vpack.c.bf16 %v1087, %v1087
    %v1218 = vld [vmem:[#allocation10] sm:$0xf]
    %v1219 = vld [vmem:[#allocation10 + $0x4] sm:$0xf]
    %v1220 = vld [vmem:[#allocation10 + $0x8] sm:$0xf]
    %v1221 = vld [vmem:[#allocation10 + $0xc] sm:$0xf]
    %v1222 = vld [vmem:[#allocation10 + $0x10] sm:$0xf]
    %v1223 = vld [vmem:[#allocation10 + $0x14] sm:$0xf]
    %v1224 = vld [vmem:[#allocation10 + $0x18] sm:$0xf]
    %v1225 = vld [vmem:[#allocation10 + $0x1c] sm:$0xf]
    %v1226 = vld [vmem:[#allocation10 + $0x20] sm:$0xf]
    %v1227 = vld [vmem:[#allocation10 + $0x24] sm:$0xf]
    %v1228 = vld [vmem:[#allocation10 + $0x28] sm:$0xf]
    %v1229 = vld [vmem:[#allocation10 + $0x2c] sm:$0xf]
    %v1230 = vld [vmem:[#allocation10 + $0x30] sm:$0xf]
    %v1231 = vld [vmem:[#allocation10 + $0x34] sm:$0xf]
    %v1232 = vld [vmem:[#allocation10 + $0x38] sm:$0xf]
    %v1233 = vld [vmem:[#allocation10 + $0x3c] sm:$0xf]
    %v1234 = vld [vmem:[#allocation10 + $0x40] sm:$0xf]
    %v1235 = vld [vmem:[#allocation10 + $0x44] sm:$0xf]
    %v1236 = vld [vmem:[#allocation10 + $0x48] sm:$0xf]
    %v1237 = vld [vmem:[#allocation10 + $0x4c] sm:$0xf]
    %v1238 = vld [vmem:[#allocation10 + $0x50] sm:$0xf]
    %v1239 = vld [vmem:[#allocation10 + $0x54] sm:$0xf]
    %v1240 = vld [vmem:[#allocation10 + $0x58] sm:$0xf]
    %v1241 = vld [vmem:[#allocation10 + $0x5c] sm:$0xf]
    %v1242 = vld [vmem:[#allocation10 + $0x60] sm:$0xf]
    %v1243 = vld [vmem:[#allocation10 + $0x64] sm:$0xf]
    %v1244 = vld [vmem:[#allocation10 + $0x68] sm:$0xf]
    %v1245 = vld [vmem:[#allocation10 + $0x6c] sm:$0xf]
    %v1246 = vld [vmem:[#allocation10 + $0x70] sm:$0xf]
    %v1247 = vld [vmem:[#allocation10 + $0x74] sm:$0xf]
    %v1248 = vld [vmem:[#allocation10 + $0x78] sm:$0xf]
    %v1249 = vld [vmem:[#allocation10 + $0x7c] sm:$0xf]
    %v1250 = vld [vmem:[#allocation10 + $0x80] sm:$0xf]
    %v1251 = vld [vmem:[#allocation10 + $0x84] sm:$0xf]
    %v1252 = vld [vmem:[#allocation10 + $0x88] sm:$0xf]
    %v1253 = vld [vmem:[#allocation10 + $0x8c] sm:$0xf]
    %v1254 = vld [vmem:[#allocation10 + $0x90] sm:$0xf]
    %v1255 = vld [vmem:[#allocation10 + $0x94] sm:$0xf]
    %v1256 = vld [vmem:[#allocation10 + $0x98] sm:$0xf]
    %v1257 = vld [vmem:[#allocation10 + $0x9c] sm:$0xf]
    %v1258 = vld [vmem:[#allocation10 + $0xa0] sm:$0xf]
    %v1259 = vld [vmem:[#allocation10 + $0xa4] sm:$0xf]
    %v1260 = vld [vmem:[#allocation10 + $0xa8] sm:$0xf]
    %v1261 = vld [vmem:[#allocation10 + $0xac] sm:$0xf]
    %v1262 = vld [vmem:[#allocation10 + $0xb0] sm:$0xf]
    %v1263 = vld [vmem:[#allocation10 + $0xb4] sm:$0xf]
    %v1264 = vld [vmem:[#allocation10 + $0xb8] sm:$0xf]
    %v1265 = vld [vmem:[#allocation10 + $0xbc] sm:$0xf]
    %v1266 = vld [vmem:[%s9] sm:$0x1]
    %v1268 = vlaneseq
    %v1269 = vshrl.u32 %v1268, 7
    %v1270 = vsub.s32 0, %v1269
    %v1271 = vrot.slane %v1266, %v1270
    %v1321 = vunpack.c.l.b16 %v1218
    %v1322 = vunpack.c.l.b16 %v1219
    %v1323 = vunpack.c.l.b16 %v1220
    %v1324 = vunpack.c.l.b16 %v1221
    %v1325 = vunpack.c.l.b16 %v1222
    %v1326 = vunpack.c.l.b16 %v1223
    %v1327 = vunpack.c.l.b16 %v1224
    %v1328 = vunpack.c.l.b16 %v1225
    %v1329 = vunpack.c.l.b16 %v1226
    %v1330 = vunpack.c.l.b16 %v1227
    %v1331 = vunpack.c.l.b16 %v1228
    %v1332 = vunpack.c.l.b16 %v1229
    %v1333 = vunpack.c.l.b16 %v1230
    %v1334 = vunpack.c.l.b16 %v1231
    %v1335 = vunpack.c.l.b16 %v1232
    %v1336 = vunpack.c.l.b16 %v1233
    %v1337 = vunpack.c.l.b16 %v1234
    %v1338 = vunpack.c.l.b16 %v1235
    %v1339 = vunpack.c.l.b16 %v1236
    %v1340 = vunpack.c.l.b16 %v1237
    %v1341 = vunpack.c.l.b16 %v1238
    %v1342 = vunpack.c.l.b16 %v1239
    %v1343 = vunpack.c.l.b16 %v1240
    %v1344 = vunpack.c.l.b16 %v1241
    %v1345 = vunpack.c.l.b16 %v1242
    %v1346 = vunpack.c.l.b16 %v1243
    %v1347 = vunpack.c.l.b16 %v1244
    %v1348 = vunpack.c.l.b16 %v1245
    %v1349 = vunpack.c.l.b16 %v1246
    %v1350 = vunpack.c.l.b16 %v1247
    %v1351 = vunpack.c.l.b16 %v1248
    %v1352 = vunpack.c.l.b16 %v1249
    %v1353 = vunpack.c.l.b16 %v1250
    %v1354 = vunpack.c.l.b16 %v1251
    %v1355 = vunpack.c.l.b16 %v1252
    %v1356 = vunpack.c.l.b16 %v1253
    %v1357 = vunpack.c.l.b16 %v1254
    %v1358 = vunpack.c.l.b16 %v1255
    %v1359 = vunpack.c.l.b16 %v1256
    %v1360 = vunpack.c.l.b16 %v1257
    %v1361 = vunpack.c.l.b16 %v1258
    %v1362 = vunpack.c.l.b16 %v1259
    %v1363 = vunpack.c.l.b16 %v1260
    %v1364 = vunpack.c.l.b16 %v1261
    %v1365 = vunpack.c.l.b16 %v1262
    %v1366 = vunpack.c.l.b16 %v1263
    %v1367 = vunpack.c.l.b16 %v1264
    %v1368 = vunpack.c.l.b16 %v1265
    %v1369 = vpack.c.b16 %v1322, %v1321
    %v1370 = vpack.c.b16 %v1324, %v1323
    %v1371 = vpack.c.b16 %v1326, %v1325
    %v1372 = vpack.c.b16 %v1328, %v1327
    %v1373 = vpack.c.b16 %v1330, %v1329
    %v1374 = vpack.c.b16 %v1332, %v1331
    %v1375 = vpack.c.b16 %v1334, %v1333
    %v1376 = vpack.c.b16 %v1336, %v1335
    %v1377 = vpack.c.b16 %v1338, %v1337
    %v1378 = vpack.c.b16 %v1340, %v1339
    %v1379 = vpack.c.b16 %v1342, %v1341
    %v1380 = vpack.c.b16 %v1344, %v1343
    %v1381 = vpack.c.b16 %v1346, %v1345
    %v1382 = vpack.c.b16 %v1348, %v1347
    %v1383 = vpack.c.b16 %v1350, %v1349
    %v1384 = vpack.c.b16 %v1352, %v1351
    %v1385 = vpack.c.b16 %v1354, %v1353
    %v1386 = vpack.c.b16 %v1356, %v1355
    %v1387 = vpack.c.b16 %v1358, %v1357
    %v1388 = vpack.c.b16 %v1360, %v1359
    %v1389 = vpack.c.b16 %v1362, %v1361
    %v1390 = vpack.c.b16 %v1364, %v1363
    %v1391 = vpack.c.b16 %v1366, %v1365
    %v1392 = vpack.c.b16 %v1368, %v1367
    %1417 = vmatprep.subr.bf16.mxu0 0
    %1418 = vmatpush1.bf16.msra.mxu0 %v1369
    %1419 = vmatprep.subr.bf16.mxu0 0
    %1420 = vmatpush1.bf16.msra.mxu0 %v1370
    %1421 = vmatprep.subr.bf16.mxu0 0
    %1422 = vmatpush1.bf16.msra.mxu0 %v1371
    %1423 = vmatprep.subr.bf16.mxu0 0
    %1424 = vmatpush1.bf16.msra.mxu0 %v1372
    %1425 = vmatprep.subr.bf16.mxu0 0
    %1426 = vmatpush1.bf16.msra.mxu0 %v1373
    %1427 = vmatprep.subr.bf16.mxu0 0
    %1428 = vmatpush1.bf16.msra.mxu0 %v1374
    %1429 = vmatprep.subr.bf16.mxu0 0
    %1430 = vmatpush1.bf16.msra.mxu0 %v1375
    %1431 = vmatprep.subr.bf16.mxu0 0
    %1432 = vmatpush1.bf16.msra.mxu0 %v1376
    %1433 = vmatprep.subr.bf16.mxu0 0
    %1434 = vmatpush1.bf16.msra.mxu0 %v1377
    %1435 = vmatprep.subr.bf16.mxu0 0
    %1436 = vmatpush1.bf16.msra.mxu0 %v1378
    %1437 = vmatprep.subr.bf16.mxu0 0
    %1438 = vmatpush1.bf16.msra.mxu0 %v1379
    %1439 = vmatprep.subr.bf16.mxu0 0
    %1440 = vmatpush1.bf16.msra.mxu0 %v1380
    %1441 = vmatprep.subr.bf16.mxu0 0
    %1442 = vmatpush1.bf16.msra.mxu0 %v1381
    %1443 = vmatprep.subr.bf16.mxu0 0
    %1444 = vmatpush1.bf16.msra.mxu0 %v1382
    %1445 = vmatprep.subr.bf16.mxu0 0
    %1446 = vmatpush1.bf16.msra.mxu0 %v1383
    %1447 = vmatprep.subr.bf16.mxu0 0
    %1448 = vmatpush1.bf16.msra.mxu0 %v1384
    %1449 = vmatprep.mubr.bf16.mxu0 %v1216
    %1450 = vmatmul.mubr.bf16.gmra.mrb[0].mxu0 %v1215
    %v1451 = vpop.f32.mrb[0].mxu0
    %v1452 = vadd.f32 %v1271, %v1451
    %v1453 = vpop.f32.mrb[0].mxu0
    %v1454 = vpop.f32.mrb[0].mxu0
    %v1455 = vpop.f32.mrb[0].mxu0
    %1456 = vdwg.mxu0
    %1457 = vmatprep.subr.bf16.mxu0 0
    %1458 = vmatpush1.bf16.msra.mxu0 %v1385
    %1459 = vmatprep.subr.bf16.mxu0 0
    %1460 = vmatpush1.bf16.msra.mxu0 %v1386
    %1461 = vmatprep.subr.bf16.mxu0 0
    %1462 = vmatpush1.bf16.msra.mxu0 %v1387
    %1463 = vmatprep.subr.bf16.mxu0 0
    %1464 = vmatpush1.bf16.msra.mxu0 %v1388
    %1465 = vmatprep.subr.bf16.mxu0 0
    %1466 = vmatpush1.bf16.msra.mxu0 %v1389
    %1467 = vmatprep.subr.bf16.mxu0 0
    %1468 = vmatpush1.bf16.msra.mxu0 %v1390
    %1469 = vmatprep.subr.bf16.mxu0 0
    %1470 = vmatpush1.bf16.msra.mxu0 %v1391
    %1471 = vmatprep.subr.bf16.mxu0 0
    %1472 = vmatpush1.bf16.msra.mxu0 %v1392
    %1473 = vmatprep.subr.bf16.mxu0 0
    %1474 = vmatpush1.bf16.msra.mxu0 0
    %1475 = vmatprep.subr.bf16.mxu0 0
    %1476 = vmatpush1.bf16.msra.mxu0 0
    %1477 = vmatprep.subr.bf16.mxu0 0
    %1478 = vmatpush1.bf16.msra.mxu0 0
    %1479 = vmatprep.subr.bf16.mxu0 0
    %1480 = vmatpush1.bf16.msra.mxu0 0
    %1481 = vmatprep.subr.bf16.mxu0 0
    %1482 = vmatpush1.bf16.msra.mxu0 0
    %1483 = vmatprep.subr.bf16.mxu0 0
    %1484 = vmatpush1.bf16.msra.mxu0 0
    %1485 = vmatprep.subr.bf16.mxu0 0
    %1486 = vmatpush1.bf16.msra.mxu0 0
    %1487 = vmatprep.subr.bf16.mxu0 0
    %1488 = vmatpush1.bf16.msra.mxu0 0
    %1489 = vmatprep.mubr.bf16.mxu0 0
    %1490 = vmatmul.mubr.bf16.gmra.mrb[0].mxu0 %v1217
    %v1491 = vpop.f32.mrb[0].mxu0
    %v1492 = vadd.f32 %v1452, %v1491
    %v1493 = vpop.f32.mrb[0].mxu0
    %v1494 = vpop.f32.mrb[0].mxu0
    %v1495 = vpop.f32.mrb[0].mxu0
    %1496 = vdwg.mxu0
    %v1497 = vtanh.pop %v1492
    %1498 = vst [vmem:[#allocation13] sm:$0xff] %v1497
    %v1499 = vadd.f32 %v1085, %v1212
    %v1500 = vadd.f32 %v1086, %v1213
    %v1501 = vadd.f32 %v1087, %v1214
    %v1502 = vpack.c.bf16 %v1499, %v1499
    %v1503 = vpack.c.bf16 %v1500, %v1500
    %v1504 = vpack.c.bf16 %v1501, %v1501
    %v1505 = vld [vmem:[#allocation11] sm:$0xf]
    %v1506 = vld [vmem:[#allocation11 + $0x4] sm:$0xf]
    %v1507 = vld [vmem:[#allocation11 + $0x8] sm:$0xf]
    %v1508 = vld [vmem:[#allocation11 + $0xc] sm:$0xf]
    %v1509 = vld [vmem:[#allocation11 + $0x10] sm:$0xf]
    %v1510 = vld [vmem:[#allocation11 + $0x14] sm:$0xf]
    %v1511 = vld [vmem:[#allocation11 + $0x18] sm:$0xf]
    %v1512 = vld [vmem:[#allocation11 + $0x1c] sm:$0xf]
    %v1513 = vld [vmem:[#allocation11 + $0x20] sm:$0xf]
    %v1514 = vld [vmem:[#allocation11 + $0x24] sm:$0xf]
    %v1515 = vld [vmem:[#allocation11 + $0x28] sm:$0xf]
    %v1516 = vld [vmem:[#allocation11 + $0x2c] sm:$0xf]
    %v1517 = vld [vmem:[#allocation11 + $0x30] sm:$0xf]
    %v1518 = vld [vmem:[#allocation11 + $0x34] sm:$0xf]
    %v1519 = vld [vmem:[#allocation11 + $0x38] sm:$0xf]
    %v1520 = vld [vmem:[#allocation11 + $0x3c] sm:$0xf]
    %v1521 = vld [vmem:[#allocation11 + $0x40] sm:$0xf]
    %v1522 = vld [vmem:[#allocation11 + $0x44] sm:$0xf]
    %v1523 = vld [vmem:[#allocation11 + $0x48] sm:$0xf]
    %v1524 = vld [vmem:[#allocation11 + $0x4c] sm:$0xf]
    %v1525 = vld [vmem:[#allocation11 + $0x50] sm:$0xf]
    %v1526 = vld [vmem:[#allocation11 + $0x54] sm:$0xf]
    %v1527 = vld [vmem:[#allocation11 + $0x58] sm:$0xf]
    %v1528 = vld [vmem:[#allocation11 + $0x5c] sm:$0xf]
    %v1529 = vld [vmem:[#allocation11 + $0x60] sm:$0xf]
    %v1530 = vld [vmem:[#allocation11 + $0x64] sm:$0xf]
    %v1531 = vld [vmem:[#allocation11 + $0x68] sm:$0xf]
    %v1532 = vld [vmem:[#allocation11 + $0x6c] sm:$0xf]
    %v1533 = vld [vmem:[#allocation11 + $0x70] sm:$0xf]
    %v1534 = vld [vmem:[#allocation11 + $0x74] sm:$0xf]
    %v1535 = vld [vmem:[#allocation11 + $0x78] sm:$0xf]
    %v1536 = vld [vmem:[#allocation11 + $0x7c] sm:$0xf]
    %v1537 = vld [vmem:[#allocation11 + $0x80] sm:$0xf]
    %v1538 = vld [vmem:[#allocation11 + $0x84] sm:$0xf]
    %v1539 = vld [vmem:[#allocation11 + $0x88] sm:$0xf]
    %v1540 = vld [vmem:[#allocation11 + $0x8c] sm:$0xf]
    %v1541 = vld [vmem:[#allocation11 + $0x90] sm:$0xf]
    %v1542 = vld [vmem:[#allocation11 + $0x94] sm:$0xf]
    %v1543 = vld [vmem:[#allocation11 + $0x98] sm:$0xf]
    %v1544 = vld [vmem:[#allocation11 + $0x9c] sm:$0xf]
    %v1545 = vld [vmem:[#allocation11 + $0xa0] sm:$0xf]
    %v1546 = vld [vmem:[#allocation11 + $0xa4] sm:$0xf]
    %v1547 = vld [vmem:[#allocation11 + $0xa8] sm:$0xf]
    %v1548 = vld [vmem:[#allocation11 + $0xac] sm:$0xf]
    %v1549 = vld [vmem:[#allocation11 + $0xb0] sm:$0xf]
    %v1550 = vld [vmem:[#allocation11 + $0xb4] sm:$0xf]
    %v1551 = vld [vmem:[#allocation11 + $0xb8] sm:$0xf]
    %v1552 = vld [vmem:[#allocation11 + $0xbc] sm:$0xf]
    %v1553 = vld [vmem:[%s11] sm:$0x1]
    %v1555 = vlaneseq
    %v1556 = vshrl.u32 %v1555, 7
    %v1557 = vsub.s32 0, %v1556
    %v1558 = vrot.slane %v1553, %v1557
    %v1608 = vunpack.c.l.b16 %v1505
    %v1609 = vunpack.c.l.b16 %v1506
    %v1610 = vunpack.c.l.b16 %v1507
    %v1611 = vunpack.c.l.b16 %v1508
    %v1612 = vunpack.c.l.b16 %v1509
    %v1613 = vunpack.c.l.b16 %v1510
    %v1614 = vunpack.c.l.b16 %v1511
    %v1615 = vunpack.c.l.b16 %v1512
    %v1616 = vunpack.c.l.b16 %v1513
    %v1617 = vunpack.c.l.b16 %v1514
    %v1618 = vunpack.c.l.b16 %v1515
    %v1619 = vunpack.c.l.b16 %v1516
    %v1620 = vunpack.c.l.b16 %v1517
    %v1621 = vunpack.c.l.b16 %v1518
    %v1622 = vunpack.c.l.b16 %v1519
    %v1623 = vunpack.c.l.b16 %v1520
    %v1624 = vunpack.c.l.b16 %v1521
    %v1625 = vunpack.c.l.b16 %v1522
    %v1626 = vunpack.c.l.b16 %v1523
    %v1627 = vunpack.c.l.b16 %v1524
    %v1628 = vunpack.c.l.b16 %v1525
    %v1629 = vunpack.c.l.b16 %v1526
    %v1630 = vunpack.c.l.b16 %v1527
    %v1631 = vunpack.c.l.b16 %v1528
    %v1632 = vunpack.c.l.b16 %v1529
    %v1633 = vunpack.c.l.b16 %v1530
    %v1634 = vunpack.c.l.b16 %v1531
    %v1635 = vunpack.c.l.b16 %v1532
    %v1636 = vunpack.c.l.b16 %v1533
    %v1637 = vunpack.c.l.b16 %v1534
    %v1638 = vunpack.c.l.b16 %v1535
    %v1639 = vunpack.c.l.b16 %v1536
    %v1640 = vunpack.c.l.b16 %v1537
    %v1641 = vunpack.c.l.b16 %v1538
    %v1642 = vunpack.c.l.b16 %v1539
    %v1643 = vunpack.c.l.b16 %v1540
    %v1644 = vunpack.c.l.b16 %v1541
    %v1645 = vunpack.c.l.b16 %v1542
    %v1646 = vunpack.c.l.b16 %v1543
    %v1647 = vunpack.c.l.b16 %v1544
    %v1648 = vunpack.c.l.b16 %v1545
    %v1649 = vunpack.c.l.b16 %v1546
    %v1650 = vunpack.c.l.b16 %v1547
    %v1651 = vunpack.c.l.b16 %v1548
    %v1652 = vunpack.c.l.b16 %v1549
    %v1653 = vunpack.c.l.b16 %v1550
    %v1654 = vunpack.c.l.b16 %v1551
    %v1655 = vunpack.c.l.b16 %v1552
    %v1656 = vpack.c.b16 %v1609, %v1608
    %v1657 = vpack.c.b16 %v1611, %v1610
    %v1658 = vpack.c.b16 %v1613, %v1612
    %v1659 = vpack.c.b16 %v1615, %v1614
    %v1660 = vpack.c.b16 %v1617, %v1616
    %v1661 = vpack.c.b16 %v1619, %v1618
    %v1662 = vpack.c.b16 %v1621, %v1620
    %v1663 = vpack.c.b16 %v1623, %v1622
    %v1664 = vpack.c.b16 %v1625, %v1624
    %v1665 = vpack.c.b16 %v1627, %v1626
    %v1666 = vpack.c.b16 %v1629, %v1628
    %v1667 = vpack.c.b16 %v1631, %v1630
    %v1668 = vpack.c.b16 %v1633, %v1632
    %v1669 = vpack.c.b16 %v1635, %v1634
    %v1670 = vpack.c.b16 %v1637, %v1636
    %v1671 = vpack.c.b16 %v1639, %v1638
    %v1672 = vpack.c.b16 %v1641, %v1640
    %v1673 = vpack.c.b16 %v1643, %v1642
    %v1674 = vpack.c.b16 %v1645, %v1644
    %v1675 = vpack.c.b16 %v1647, %v1646
    %v1676 = vpack.c.b16 %v1649, %v1648
    %v1677 = vpack.c.b16 %v1651, %v1650
    %v1678 = vpack.c.b16 %v1653, %v1652
    %v1679 = vpack.c.b16 %v1655, %v1654
    %1704 = vmatprep.subr.bf16.mxu0 0
    %1705 = vmatpush1.bf16.msra.mxu0 %v1656
    %1706 = vmatprep.subr.bf16.mxu0 0
    %1707 = vmatpush1.bf16.msra.mxu0 %v1657
    %1708 = vmatprep.subr.bf16.mxu0 0
    %1709 = vmatpush1.bf16.msra.mxu0 %v1658
    %1710 = vmatprep.subr.bf16.mxu0 0
    %1711 = vmatpush1.bf16.msra.mxu0 %v1659
    %1712 = vmatprep.subr.bf16.mxu0 0
    %1713 = vmatpush1.bf16.msra.mxu0 %v1660
    %1714 = vmatprep.subr.bf16.mxu0 0
    %1715 = vmatpush1.bf16.msra.mxu0 %v1661
    %1716 = vmatprep.subr.bf16.mxu0 0
    %1717 = vmatpush1.bf16.msra.mxu0 %v1662
    %1718 = vmatprep.subr.bf16.mxu0 0
    %1719 = vmatpush1.bf16.msra.mxu0 %v1663
    %1720 = vmatprep.subr.bf16.mxu0 0
    %1721 = vmatpush1.bf16.msra.mxu0 %v1664
    %1722 = vmatprep.subr.bf16.mxu0 0
    %1723 = vmatpush1.bf16.msra.mxu0 %v1665
    %1724 = vmatprep.subr.bf16.mxu0 0
    %1725 = vmatpush1.bf16.msra.mxu0 %v1666
    %1726 = vmatprep.subr.bf16.mxu0 0
    %1727 = vmatpush1.bf16.msra.mxu0 %v1667
    %1728 = vmatprep.subr.bf16.mxu0 0
    %1729 = vmatpush1.bf16.msra.mxu0 %v1668
    %1730 = vmatprep.subr.bf16.mxu0 0
    %1731 = vmatpush1.bf16.msra.mxu0 %v1669
    %1732 = vmatprep.subr.bf16.mxu0 0
    %1733 = vmatpush1.bf16.msra.mxu0 %v1670
    %1734 = vmatprep.subr.bf16.mxu0 0
    %1735 = vmatpush1.bf16.msra.mxu0 %v1671
    %1736 = vmatprep.mubr.bf16.mxu0 %v1503
    %1737 = vmatmul.mubr.bf16.gmra.mrb[0].mxu0 %v1502
    %v1738 = vpop.f32.mrb[0].mxu0
    %v1739 = vadd.f32 %v1558, %v1738
    %v1740 = vpop.f32.mrb[0].mxu0
    %v1741 = vpop.f32.mrb[0].mxu0
    %v1742 = vpop.f32.mrb[0].mxu0
    %1743 = vdwg.mxu0
    %1744 = vmatprep.subr.bf16.mxu0 0
    %1745 = vmatpush1.bf16.msra.mxu0 %v1672
    %1746 = vmatprep.subr.bf16.mxu0 0
    %1747 = vmatpush1.bf16.msra.mxu0 %v1673
    %1748 = vmatprep.subr.bf16.mxu0 0
    %1749 = vmatpush1.bf16.msra.mxu0 %v1674
    %1750 = vmatprep.subr.bf16.mxu0 0
    %1751 = vmatpush1.bf16.msra.mxu0 %v1675
    %1752 = vmatprep.subr.bf16.mxu0 0
    %1753 = vmatpush1.bf16.msra.mxu0 %v1676
    %1754 = vmatprep.subr.bf16.mxu0 0
    %1755 = vmatpush1.bf16.msra.mxu0 %v1677
    %1756 = vmatprep.subr.bf16.mxu0 0
    %1757 = vmatpush1.bf16.msra.mxu0 %v1678
    %1758 = vmatprep.subr.bf16.mxu0 0
    %1759 = vmatpush1.bf16.msra.mxu0 %v1679
    %1760 = vmatprep.subr.bf16.mxu0 0
    %1761 = vmatpush1.bf16.msra.mxu0 0
    %1762 = vmatprep.subr.bf16.mxu0 0
    %1763 = vmatpush1.bf16.msra.mxu0 0
    %1764 = vmatprep.subr.bf16.mxu0 0
    %1765 = vmatpush1.bf16.msra.mxu0 0
    %1766 = vmatprep.subr.bf16.mxu0 0
    %1767 = vmatpush1.bf16.msra.mxu0 0
    %1768 = vmatprep.subr.bf16.mxu0 0
    %1769 = vmatpush1.bf16.msra.mxu0 0
    %1770 = vmatprep.subr.bf16.mxu0 0
    %1771 = vmatpush1.bf16.msra.mxu0 0
    %1772 = vmatprep.subr.bf16.mxu0 0
    %1773 = vmatpush1.bf16.msra.mxu0 0
    %1774 = vmatprep.subr.bf16.mxu0 0
    %1775 = vmatpush1.bf16.msra.mxu0 0
    %1776 = vmatprep.mubr.bf16.mxu0 0
    %1777 = vmatmul.mubr.bf16.gmra.mrb[0].mxu0 %v1504
    %v1778 = vpop.f32.mrb[0].mxu0
    %v1779 = vadd.f32 %v1739, %v1778
    %v1780 = vpop.f32.mrb[0].mxu0
    %v1781 = vpop.f32.mrb[0].mxu0
    %v1782 = vpop.f32.mrb[0].mxu0
    %1783 = vdwg.mxu0
    %1784 = vst [vmem:[#allocation14] sm:$0xff] %v1779
    // Predicated region
    $region74: #{tpu_custom_call.1} parent=1 // pred_check
      _
    $region75: #{tpu_custom_call.1} parent=1 // pred_check_branch
      %1786 = sbr.rel (0) target = $region77
    $region76: #{tpu_custom_call.1} parent=1 // pred_region
      %s1788 = ssub.s32 128, 128
      %1789 = vsyncadd [#allocation4], %s1788
      %s1791 = sshll.u32 [#allocation13], 4
      %s1792 = int_to_ptr.vmem [resolvable:$true] %s1791
      %1794 = dma.vmem_to_hbm [thread:$0]  %s1792, 128, %s12, [#allocation4]
    $region77: #{tpu_custom_call.1} parent=1 // pred_fallthru
      _
    // Predicated region
    $region78: #{tpu_custom_call.1} parent=1 // pred_check
      _
    $region79: #{tpu_custom_call.1} parent=1 // pred_check_branch
      %1796 = sbr.rel (0) target = $region81
    $region80: #{tpu_custom_call.1} parent=1 // pred_region
      %s1798 = ssub.s32 128, 128
      %1799 = vsyncadd [#allocation15], %s1798
      %s1801 = sshll.u32 [#allocation14], 4
      %s1802 = int_to_ptr.vmem [resolvable:$true] %s1801
      %1804 = dma.vmem_to_hbm [thread:$0]  %s1802, 128, %s13, [#allocation15]
    $region81: #{tpu_custom_call.1} parent=1 // pred_fallthru
      _
    // Predicated region
    $region82: #{tpu_custom_call.1} parent=1 // pred_check
      _
    $region83: #{tpu_custom_call.1} parent=1 // pred_check_branch
      %1806 = sbr.rel (0) target = $region85
    $region84: #{tpu_custom_call.1} parent=1 // pred_region
      %1807 = dma.done [#allocation4], 128
    $region85: #{tpu_custom_call.1} parent=1 // pred_fallthru
      _
    // Predicated region
    $region86: #{tpu_custom_call.1} parent=1 // pred_check
      _
    $region87: #{tpu_custom_call.1} parent=1 // pred_check_branch
      %1809 = sbr.rel (0) target = $region89
    $region88: #{tpu_custom_call.1} parent=1 // pred_region
      %1810 = dma.done [#allocation15], 128
    $region89: #{tpu_custom_call.1} parent=1 // pred_fallthru
      _
    %1811 = vsyncpa [#allocation3], 1
    %1812 = vsyncpa [#allocation6], 1
    %1813 = vsyncpa [#allocation9], 1
    %1814 = vsyncpa [#allocation12], 1
    %1815 = vsyncpa [#allocation4], 1
    %1816 = vsyncpa [#allocation15], 1

</llo_original>
